<compile_context>
chip_gen: v6e
topology: v6e:2x2x1
jax: 0.10.0
libtpu: 0.0.40
codegen_flags: <defaults>
</compile_context>

<pallas_src>
import math

import jax
import jax.numpy as jnp
from jax import lax
from jax.experimental import pallas as pl
from jax.experimental.pallas import tpu as pltpu


def _enc_gru_kernel(seq_ref, w_ih_ref, w_hh_ref, b_x_ref, b_hn_ref,
                    out_ref, xr_ref, xz_ref, xn_ref, h_ref):
    """One grid step = `block_t` GRU timesteps (all batch rows at once).

    seq_ref : (block_t*Bp, Fin)   flattened input slab for this time chunk
    w_ih_ref: (3, Fin, H)         input->gate weights, gate order (r, z, n)
    w_hh_ref: (3, H,   H)         hidden->gate weights
    b_x_ref : (3, 1,   H)         biases folded into the input projections
                                  (r: b_ir+b_hr, z: b_iz+b_hz, n: b_in)
    b_hn_ref: (1, H)              hidden bias of gate n (stays inside r*(.))
    out_ref : (block_t*Bp, H)     hidden state after every timestep
    xr/xz/xn: (block_t*Bp, H) f32 scratch for precomputed input projections
    h_ref   : (Bp, H) f32 scratch hidden state carried across time chunks
    """
    rows, _ = seq_ref.shape
    b_pad, _ = h_ref.shape
    block_t = rows // b_pad

    # First time chunk -> reset the carried hidden state.
    @pl.when(pl.program_id(0) == 0)
    def _init():
        h_ref[...] = jnp.zeros_like(h_ref)

    # Hoisted, VMEM-resident parameter loads (static first-axis indexing only).
    w_hr, w_hz, w_hn = w_hh_ref[0], w_hh_ref[1], w_hh_ref[2]   # (H, H) each
    b_hn = b_hn_ref[...]                                       # (1, H)

    # ---- Phase 1: batch ALL input->gate projections of this chunk into three
    # large MXU matmuls (hoists 3*block_t tiny matmuls off the serial path). --
    x = seq_ref[...].astype(jnp.float32)                       # (rows, Fin)
    xr_ref[...] = (jnp.dot(x, w_ih_ref[0], preferred_element_type=jnp.float32)
                   + b_x_ref[0])
    xz_ref[...] = (jnp.dot(x, w_ih_ref[1], preferred_element_type=jnp.float32)
                   + b_x_ref[1])
    xn_ref[...] = (jnp.dot(x, w_ih_ref[2], preferred_element_type=jnp.float32)
                   + b_x_ref[2])

    # ---- Phase 2: sequential recurrence; only 3 (Bp,H)@(H,H) matmuls +
    # elementwise per step remain on the critical path. -----------------------
    def step(t, h_prev):
        row = pl.multiple_of(t * b_pad, 8)                     # sublane-aligned
        hr = jnp.dot(h_prev, w_hr, preferred_element_type=jnp.float32)
        hz = jnp.dot(h_prev, w_hz, preferred_element_type=jnp.float32)
        hn = jnp.dot(h_prev, w_hn, preferred_element_type=jnp.float32)
        r = jax.nn.sigmoid(xr_ref[pl.ds(row, b_pad), :] + hr)
        z = jax.nn.sigmoid(xz_ref[pl.ds(row, b_pad), :] + hz)
        n = jnp.tanh(xn_ref[pl.ds(row, b_pad), :] + r * (hn + b_hn))
        h_new = (1.0 - z) * n + z * h_prev
        out_ref[pl.ds(row, b_pad), :] = h_new.astype(out_ref.dtype)
        return h_new

    # Carry h as a loop value; touch the carried VMEM scratch once per chunk.
    h_final = lax.fori_loop(0, block_t, step, h_ref[...],
                            unroll=True if block_t <= 16 else 4)
    h_ref[...] = h_final


def _choose_block_t(T, b_pad, f_in, h, budget_bytes=8 << 20):
    """Largest divisor of T whose VMEM footprint (double-buffered seq/out
    blocks + three f32 projection scratches) fits a conservative budget that is
    safe on v5e/v6e/v7x default scoped VMEM."""
    fixed = 2 * 4 * 3 * (f_in * h + h * h) + 4 * b_pad * h + (64 << 10)
    per_t = 4 * b_pad * (2 * f_in + 2 * h + 3 * h)
    max_bt = max(1, (budget_bytes - fixed) // per_t)
    if max_bt >= T:
        return T
    bt = 1
    for d in range(1, int(max_bt) + 1):
        if T % d == 0:
            bt = d
    return bt


def enc_gru_forward(seq, params, *, block_t=None):
    """Pallas implementation of EncGRU.forward (num_layers=1, dropout=0).

    seq    : (T, B, feat_in) float32
    params : PyTorch-layout GRU parameters:
             w_ih (3H, feat_in), w_hh (3H, H), b_ih (3H,), b_hh (3H,)
    returns: (T, 1, B, feat_out)  -- stacked per-timestep hidden states.
    """
    T, B, f_in = seq.shape
    H = params["w_hh"].shape[1]

    # Wrapper-side layout plumbing (free): stack gates on a leading axis,
    # pre-transpose so the kernel does plain `x @ W` / `h @ U` matmuls, and
    # fold every bias that can be folded into the input projection.
    w_ih = jnp.transpose(params["w_ih"].reshape(3, H, f_in), (0, 2, 1))  # (3,Fin,H)
    w_hh = jnp.transpose(params["w_hh"].reshape(3, H, H), (0, 2, 1))     # (3,H,H)
    b_ih = params["b_ih"].reshape(3, 1, H)
    b_hh = params["b_hh"].reshape(3, 1, H)
    b_x = jnp.stack([b_ih[0] + b_hh[0],            # gate r: b_ir + b_hr
                     b_ih[1] + b_hh[1],            # gate z: b_iz + b_hz
                     b_ih[2]], axis=0)             # gate n: b_in only
    b_hn = b_hh[2]                                 # (1, H), applied in-loop

    # Pad batch to a sublane multiple (8) so the flattened (T*Bp, F) layout is
    # tile-aligned and every per-step slice is an aligned pl.ds window.
    b_pad = ((B + 7) // 8) * 8
    seq_p = seq if b_pad == B else jnp.pad(seq, ((0, 0), (0, b_pad - B), (0, 0)))
    seq_flat = seq_p.reshape(T * b_pad, f_in)

    if block_t is None:
        block_t = _choose_block_t(T, b_pad, f_in, H)
    assert T % block_t == 0, (T, block_t)
    rows = block_t * b_pad

    grid_spec = pltpu.PrefetchScalarGridSpec(
        num_scalar_prefetch=0,
        grid=(T // block_t,),                      # sequential time chunks
        in_specs=[
            pl.BlockSpec((rows, f_in), lambda t: (t, 0)),
            pl.BlockSpec((3, f_in, H), lambda t: (0, 0, 0)),   # VMEM-resident
            pl.BlockSpec((3, H, H), lambda t: (0, 0, 0)),
            pl.BlockSpec((3, 1, H), lambda t: (0, 0, 0)),
            pl.BlockSpec((1, H), lambda t: (0, 0)),
        ],
        out_specs=pl.BlockSpec((rows, H), lambda t: (t, 0)),
        scratch_shapes=[
            pltpu.VMEM((rows, H), jnp.float32),    # xr projections
            pltpu.VMEM((rows, H), jnp.float32),    # xz projections
            pltpu.VMEM((rows, H), jnp.float32),    # xn projections
            pltpu.VMEM((b_pad, H), jnp.float32),   # carried hidden state
        ],
    )

    out_flat = pl.pallas_call(
        _enc_gru_kernel,
        out_shape=jax.ShapeDtypeStruct((T * b_pad, H), seq.dtype),
        grid_spec=grid_spec,
        compiler_params=pltpu.CompilerParams(
            dimension_semantics=("arbitrary",)),   # recurrence => sequential
    )(seq_flat, w_ih, w_hh, b_x, b_hn)

    out = out_flat.reshape(T, b_pad, H)[:, :B, :]
    # PyTorch returns torch.stack of per-step (num_layers=1, B, H) hidden states.
    return out.reshape(T, 1, B, H)


def init_enc_gru_params(key, feat_in, feat_out):
    """Mirror nn.GRU default init: U(-1/sqrt(H), 1/sqrt(H)) for every tensor."""
    H = feat_out
    bound = 1.0 / math.sqrt(H)
    k1, k2, k3, k4 = jax.random.split(key, 4)
    return {
        "w_ih": jax.random.uniform(k1, (3 * H, feat_in), jnp.float32, -bound, bound),
        "w_hh": jax.random.uniform(k2, (3 * H, H), jnp.float32, -bound, bound),
        "b_ih": jax.random.uniform(k3, (3 * H,), jnp.float32, -bound, bound),
        "b_hh": jax.random.uniform(k4, (3 * H,), jnp.float32, -bound, bound),
    }


def _reference_forward(seq, params):
    """Pure-JAX reference matching torch.nn.GRU (single layer) + EncGRU loop."""
    T, B, _ = seq.shape
    H = params["w_hh"].shape[1]
    w_ih, w_hh = params["w_ih"], params["w_hh"]
    b_ih, b_hh = params["b_ih"], params["b_hh"]
    Wr, Wz, Wn = w_ih[:H], w_ih[H:2 * H], w_ih[2 * H:]
    Ur, Uz, Un = w_hh[:H], w_hh[H:2 * H], w_hh[2 * H:]
    bir, biz, bin_ = b_ih[:H], b_ih[H:2 * H], b_ih[2 * H:]
    bhr, bhz, bhn = b_hh[:H], b_hh[H:2 * H], b_hh[2 * H:]
    h = jnp.zeros((B, H), jnp.float32)
    hs = []
    for t in range(T):
        x = seq[t]
        r = jax.nn.sigmoid(x @ Wr.T + bir + h @ Ur.T + bhr)
        z = jax.nn.sigmoid(x @ Wz.T + biz + h @ Uz.T + bhz)
        n = jnp.tanh(x @ Wn.T + bin_ + r * (h @ Un.T + bhn))
        h = (1.0 - z) * n + z * h
        hs.append(h)
    return jnp.stack(hs, 0)[:, None, :, :]          # (T, 1, B, H)


if __name__ == "__main__":
    key = jax.random.PRNGKey(0)
    k_seq, k_par = jax.random.split(key)

    T, B, Fin, H = 8, 2, 32, 32       # seq len, batch, feat_in, feat_out
    seq = jax.random.normal(k_seq, (T, B, Fin), dtype=jnp.float32)
    params = init_enc_gru_params(k_par, feat_in=Fin, feat_out=H)

    out = enc_gru_forward(seq, params)
    out = jax.block_until_ready(out)

    ref = _reference_forward(seq, params)
    assert out.shape == (T, 1, B, H), out.shape
    max_err = float(jnp.max(jnp.abs(out - ref)))
    assert jnp.allclose(out, ref, atol=1e-4, rtol=1e-4), f"mismatch, max_err={max_err}"

    print("KERNEL_OK")
</pallas_src>

<mosaic_0001>
module attributes {stable_mosaic.version = 11 : i64} {
  func.func @_enc_gru_kernel(%arg0: i32, %arg1: memref<64x32xf32, #tpu.memory_space<vmem>>, %arg2: memref<3x32x32xf32, #tpu.memory_space<vmem>>, %arg3: memref<3x32x32xf32, #tpu.memory_space<vmem>>, %arg4: memref<3x1x32xf32, #tpu.memory_space<vmem>>, %arg5: memref<1x32xf32, #tpu.memory_space<vmem>>, %arg6: memref<64x32xf32, #tpu.memory_space<vmem>>, %arg7: memref<64x32xf32, #tpu.memory_space<vmem>>, %arg8: memref<64x32xf32, #tpu.memory_space<vmem>>, %arg9: memref<64x32xf32, #tpu.memory_space<vmem>>, %arg10: memref<8x32xf32, #tpu.memory_space<vmem>>) attributes {dimension_semantics = [#tpu.dimension_semantics<arbitrary>], iteration_bounds = array<i64: 1>, scalar_prefetch = 0 : i64, scratch_operands = 4 : i64, tpu.core_type = #tpu.core_type<tc>, window_params = [{transform_indices = @transform_0, window_bounds = array<i64: 64, 32>}, {pipeline_mode = #tpu.pipeline_mode<synchronous>, transform_indices = @transform_1, window_bounds = array<i64: 3, 32, 32>}, {pipeline_mode = #tpu.pipeline_mode<synchronous>, transform_indices = @transform_2, window_bounds = array<i64: 3, 32, 32>}, {pipeline_mode = #tpu.pipeline_mode<synchronous>, transform_indices = @transform_3, window_bounds = array<i64: 3, 1, 32>}, {pipeline_mode = #tpu.pipeline_mode<synchronous>, transform_indices = @transform_4, window_bounds = array<i64: 1, 32>}, {transform_indices = @transform_5, window_bounds = array<i64: 64, 32>}]} {
    %c0_i32 = arith.constant 0 : i32
    %0 = arith.cmpi eq, %arg0, %c0_i32 : i32
    %1 = arith.extui %0 : i1 to i32
    %c0_i32_0 = arith.constant 0 : i32
    %2 = arith.cmpi ne, %1, %c0_i32_0 : i32
    scf.if %2 {
      %cst_130 = arith.constant 0.000000e+00 : f32
      %317 = vector.broadcast %cst_130 : f32 to vector<8x32xf32>
      %c0_131 = arith.constant 0 : index
      %c0_132 = arith.constant 0 : index
      %318 = vector.load %arg10[%c0_131, %c0_132] : memref<8x32xf32, #tpu.memory_space<vmem>>, vector<8x32xf32>
      tpu.vector_store %arg10[%c0_131, %c0_132], %317 {strides = array<i32>} : memref<8x32xf32, #tpu.memory_space<vmem>>, vector<8x32xf32>,
    } else {
    }
    %c0 = arith.constant 0 : index
    %c0_1 = arith.constant 0 : index
    %c0_2 = arith.constant 0 : index
    %3 = vector.load %arg3[%c0, %c0_1, %c0_2] : memref<3x32x32xf32, #tpu.memory_space<vmem>>, vector<1x32x32xf32>
    %4 = vector.shape_cast %3 : vector<1x32x32xf32> to vector<32x32xf32>
    %c1 = arith.constant 1 : index
    %c0_3 = arith.constant 0 : index
    %c0_4 = arith.constant 0 : index
    %5 = vector.load %arg3[%c1, %c0_3, %c0_4] : memref<3x32x32xf32, #tpu.memory_space<vmem>>, vector<1x32x32xf32>
    %6 = vector.shape_cast %5 : vector<1x32x32xf32> to vector<32x32xf32>
    %c2 = arith.constant 2 : index
    %c0_5 = arith.constant 0 : index
    %c0_6 = arith.constant 0 : index
    %7 = vector.load %arg3[%c2, %c0_5, %c0_6] : memref<3x32x32xf32, #tpu.memory_space<vmem>>, vector<1x32x32xf32>
    %8 = vector.shape_cast %7 : vector<1x32x32xf32> to vector<32x32xf32>
    %c0_7 = arith.constant 0 : index
    %c0_8 = arith.constant 0 : index
    %9 = vector.load %arg5[%c0_7, %c0_8] : memref<1x32xf32, #tpu.memory_space<vmem>>, vector<1x32xf32>
    %c0_9 = arith.constant 0 : index
    %c0_10 = arith.constant 0 : index
    %10 = vector.load %arg1[%c0_9, %c0_10] : memref<64x32xf32, #tpu.memory_space<vmem>>, vector<64x32xf32>
    %c0_11 = arith.constant 0 : index
    %c0_12 = arith.constant 0 : index
    %c0_13 = arith.constant 0 : index
    %11 = vector.load %arg2[%c0_11, %c0_12, %c0_13] : memref<3x32x32xf32, #tpu.memory_space<vmem>>, vector<1x32x32xf32>
    %12 = vector.shape_cast %11 : vector<1x32x32xf32> to vector<32x32xf32>
    %cst = arith.constant dense<0.000000e+00> : vector<64x32xf32>
    %13 = tpu.matmul %10, %12, %cst {dimension_numbers = #tpu.dot_dimension_numbers<[1], [0], [0], [1], [0, 0, 1, 1], [], []>} : vector<64x32xf32>, vector<32x32xf32>, vector<64x32xf32> -> vector<64x32xf32>
    %c0_14 = arith.constant 0 : index
    %c0_15 = arith.constant 0 : index
    %c0_16 = arith.constant 0 : index
    %14 = vector.load %arg4[%c0_14, %c0_15, %c0_16] : memref<3x1x32xf32, #tpu.memory_space<vmem>>, vector<1x1x32xf32>
    %15 = vector.shape_cast %14 : vector<1x1x32xf32> to vector<1x32xf32>
    %16 = vector.broadcast %15 : vector<1x32xf32> to vector<64x32xf32>
    %17 = arith.addf %13, %16 : vector<64x32xf32>
    %c0_17 = arith.constant 0 : index
    %c0_18 = arith.constant 0 : index
    %18 = vector.load %arg7[%c0_17, %c0_18] : memref<64x32xf32, #tpu.memory_space<vmem>>, vector<64x32xf32>
    tpu.vector_store %arg7[%c0_17, %c0_18], %17 {strides = array<i32>} : memref<64x32xf32, #tpu.memory_space<vmem>>, vector<64x32xf32>,
    %c1_19 = arith.constant 1 : index
    %c0_20 = arith.constant 0 : index
    %c0_21 = arith.constant 0 : index
    %19 = vector.load %arg2[%c1_19, %c0_20, %c0_21] : memref<3x32x32xf32, #tpu.memory_space<vmem>>, vector<1x32x32xf32>
    %20 = vector.shape_cast %19 : vector<1x32x32xf32> to vector<32x32xf32>
    %cst_22 = arith.constant dense<0.000000e+00> : vector<64x32xf32>
    %21 = tpu.matmul %10, %20, %cst_22 {dimension_numbers = #tpu.dot_dimension_numbers<[1], [0], [0], [1], [0, 0, 1, 1], [], []>} : vector<64x32xf32>, vector<32x32xf32>, vector<64x32xf32> -> vector<64x32xf32>
    %c1_23 = arith.constant 1 : index
    %c0_24 = arith.constant 0 : index
    %c0_25 = arith.constant 0 : index
    %22 = vector.load %arg4[%c1_23, %c0_24, %c0_25] : memref<3x1x32xf32, #tpu.memory_space<vmem>>, vector<1x1x32xf32>
    %23 = vector.shape_cast %22 : vector<1x1x32xf32> to vector<1x32xf32>
    %24 = vector.broadcast %23 : vector<1x32xf32> to vector<64x32xf32>
    %25 = arith.addf %21, %24 : vector<64x32xf32>
    %c0_26 = arith.constant 0 : index
    %c0_27 = arith.constant 0 : index
    %26 = vector.load %arg8[%c0_26, %c0_27] : memref<64x32xf32, #tpu.memory_space<vmem>>, vector<64x32xf32>
    tpu.vector_store %arg8[%c0_26, %c0_27], %25 {strides = array<i32>} : memref<64x32xf32, #tpu.memory_space<vmem>>, vector<64x32xf32>,
    %c2_28 = arith.constant 2 : index
    %c0_29 = arith.constant 0 : index
    %c0_30 = arith.constant 0 : index
    %27 = vector.load %arg2[%c2_28, %c0_29, %c0_30] : memref<3x32x32xf32, #tpu.memory_space<vmem>>, vector<1x32x32xf32>
    %28 = vector.shape_cast %27 : vector<1x32x32xf32> to vector<32x32xf32>
    %cst_31 = arith.constant dense<0.000000e+00> : vector<64x32xf32>
    %29 = tpu.matmul %10, %28, %cst_31 {dimension_numbers = #tpu.dot_dimension_numbers<[1], [0], [0], [1], [0, 0, 1, 1], [], []>} : vector<64x32xf32>, vector<32x32xf32>, vector<64x32xf32> -> vector<64x32xf32>
    %c2_32 = arith.constant 2 : index
    %c0_33 = arith.constant 0 : index
    %c0_34 = arith.constant 0 : index
    %30 = vector.load %arg4[%c2_32, %c0_33, %c0_34] : memref<3x1x32xf32, #tpu.memory_space<vmem>>, vector<1x1x32xf32>
    %31 = vector.shape_cast %30 : vector<1x1x32xf32> to vector<1x32xf32>
    %32 = vector.broadcast %31 : vector<1x32xf32> to vector<64x32xf32>
    %33 = arith.addf %29, %32 : vector<64x32xf32>
    %c0_35 = arith.constant 0 : index
    %c0_36 = arith.constant 0 : index
    %34 = vector.load %arg9[%c0_35, %c0_36] : memref<64x32xf32, #tpu.memory_space<vmem>>, vector<64x32xf32>
    tpu.vector_store %arg9[%c0_35, %c0_36], %33 {strides = array<i32>} : memref<64x32xf32, #tpu.memory_space<vmem>>, vector<64x32xf32>,
    %c0_37 = arith.constant 0 : index
    %c0_38 = arith.constant 0 : index
    %35 = vector.load %arg10[%c0_37, %c0_38] : memref<8x32xf32, #tpu.memory_space<vmem>>, vector<8x32xf32>
    %c0_i32_39 = arith.constant 0 : i32
    %c8_i32 = arith.constant 8 : i32
    %36 = arith.muli %c0_i32_39, %c8_i32 : i32
    %37 = tpu.assume_multiple %36, 8 : i32
    %cst_40 = arith.constant dense<0.000000e+00> : vector<8x32xf32>
    %38 = tpu.matmul %35, %4, %cst_40 {dimension_numbers = #tpu.dot_dimension_numbers<[1], [0], [0], [1], [0, 0, 1, 1], [], []>} : vector<8x32xf32>, vector<32x32xf32>, vector<8x32xf32> -> vector<8x32xf32>
    %cst_41 = arith.constant dense<0.000000e+00> : vector<8x32xf32>
    %39 = tpu.matmul %35, %6, %cst_41 {dimension_numbers = #tpu.dot_dimension_numbers<[1], [0], [0], [1], [0, 0, 1, 1], [], []>} : vector<8x32xf32>, vector<32x32xf32>, vector<8x32xf32> -> vector<8x32xf32>
    %cst_42 = arith.constant dense<0.000000e+00> : vector<8x32xf32>
    %40 = tpu.matmul %35, %8, %cst_42 {dimension_numbers = #tpu.dot_dimension_numbers<[1], [0], [0], [1], [0, 0, 1, 1], [], []>} : vector<8x32xf32>, vector<32x32xf32>, vector<8x32xf32> -> vector<8x32xf32>
    %41 = arith.index_cast %37 : i32 to index
    %c0_43 = arith.constant 0 : index
    %42 = vector.load %arg7[%41, %c0_43] : memref<64x32xf32, #tpu.memory_space<vmem>>, vector<8x32xf32>
    %43 = arith.addf %42, %38 : vector<8x32xf32>
    %44 = arith.negf %43 : vector<8x32xf32>
    %45 = math.exp %44 : vector<8x32xf32>
    %cst_44 = arith.constant 1.000000e+00 : f32
    %46 = vector.broadcast %cst_44 : f32 to vector<8x32xf32>
    %47 = arith.addf %46, %45 : vector<8x32xf32>
    %48 = arith.divf %46, %47 : vector<8x32xf32>
    %49 = arith.index_cast %37 : i32 to index
    %c0_45 = arith.constant 0 : index
    %50 = vector.load %arg8[%49, %c0_45] : memref<64x32xf32, #tpu.memory_space<vmem>>, vector<8x32xf32>
    %51 = arith.addf %50, %39 : vector<8x32xf32>
    %52 = arith.negf %51 : vector<8x32xf32>
    %53 = math.exp %52 : vector<8x32xf32>
    %cst_46 = arith.constant 1.000000e+00 : f32
    %54 = vector.broadcast %cst_46 : f32 to vector<8x32xf32>
    %55 = arith.addf %54, %53 : vector<8x32xf32>
    %56 = arith.divf %54, %55 : vector<8x32xf32>
    %57 = arith.index_cast %37 : i32 to index
    %c0_47 = arith.constant 0 : index
    %58 = vector.load %arg9[%57, %c0_47] : memref<64x32xf32, #tpu.memory_space<vmem>>, vector<8x32xf32>
    %59 = vector.broadcast %9 : vector<1x32xf32> to vector<8x32xf32>
    %60 = arith.addf %40, %59 : vector<8x32xf32>
    %61 = arith.mulf %48, %60 : vector<8x32xf32>
    %62 = arith.addf %58, %61 : vector<8x32xf32>
    %63 = math.tanh %62 : vector<8x32xf32>
    %cst_48 = arith.constant 1.000000e+00 : f32
    %64 = vector.broadcast %cst_48 : f32 to vector<8x32xf32>
    %65 = arith.subf %64, %56 : vector<8x32xf32>
    %66 = arith.mulf %65, %63 : vector<8x32xf32>
    %67 = arith.mulf %56, %35 : vector<8x32xf32>
    %68 = arith.addf %66, %67 : vector<8x32xf32>
    %69 = arith.index_cast %37 : i32 to index
    %c0_49 = arith.constant 0 : index
    %70 = vector.load %arg6[%69, %c0_49] : memref<64x32xf32, #tpu.memory_space<vmem>>, vector<8x32xf32>
    tpu.vector_store %arg6[%69, %c0_49], %68 {strides = array<i32>} : memref<64x32xf32, #tpu.memory_space<vmem>>, vector<8x32xf32>,
    %c1_i32 = arith.constant 1 : i32
    %c8_i32_50 = arith.constant 8 : i32
    %71 = arith.muli %c1_i32, %c8_i32_50 : i32
    %72 = tpu.assume_multiple %71, 8 : i32
    %cst_51 = arith.constant dense<0.000000e+00> : vector<8x32xf32>
    %73 = tpu.matmul %68, %4, %cst_51 {dimension_numbers = #tpu.dot_dimension_numbers<[1], [0], [0], [1], [0, 0, 1, 1], [], []>} : vector<8x32xf32>, vector<32x32xf32>, vector<8x32xf32> -> vector<8x32xf32>
    %cst_52 = arith.constant dense<0.000000e+00> : vector<8x32xf32>
    %74 = tpu.matmul %68, %6, %cst_52 {dimension_numbers = #tpu.dot_dimension_numbers<[1], [0], [0], [1], [0, 0, 1, 1], [], []>} : vector<8x32xf32>, vector<32x32xf32>, vector<8x32xf32> -> vector<8x32xf32>
    %cst_53 = arith.constant dense<0.000000e+00> : vector<8x32xf32>
    %75 = tpu.matmul %68, %8, %cst_53 {dimension_numbers = #tpu.dot_dimension_numbers<[1], [0], [0], [1], [0, 0, 1, 1], [], []>} : vector<8x32xf32>, vector<32x32xf32>, vector<8x32xf32> -> vector<8x32xf32>
    %76 = arith.index_cast %72 : i32 to index
    %c0_54 = arith.constant 0 : index
    %77 = vector.load %arg7[%76, %c0_54] : memref<64x32xf32, #tpu.memory_space<vmem>>, vector<8x32xf32>
    %78 = arith.addf %77, %73 : vector<8x32xf32>
    %79 = arith.negf %78 : vector<8x32xf32>
    %80 = math.exp %79 : vector<8x32xf32>
    %cst_55 = arith.constant 1.000000e+00 : f32
    %81 = vector.broadcast %cst_55 : f32 to vector<8x32xf32>
    %82 = arith.addf %81, %80 : vector<8x32xf32>
    %83 = arith.divf %81, %82 : vector<8x32xf32>
    %84 = arith.index_cast %72 : i32 to index
    %c0_56 = arith.constant 0 : index
    %85 = vector.load %arg8[%84, %c0_56] : memref<64x32xf32, #tpu.memory_space<vmem>>, vector<8x32xf32>
    %86 = arith.addf %85, %74 : vector<8x32xf32>
    %87 = arith.negf %86 : vector<8x32xf32>
    %88 = math.exp %87 : vector<8x32xf32>
    %cst_57 = arith.constant 1.000000e+00 : f32
    %89 = vector.broadcast %cst_57 : f32 to vector<8x32xf32>
    %90 = arith.addf %89, %88 : vector<8x32xf32>
    %91 = arith.divf %89, %90 : vector<8x32xf32>
    %92 = arith.index_cast %72 : i32 to index
    %c0_58 = arith.constant 0 : index
    %93 = vector.load %arg9[%92, %c0_58] : memref<64x32xf32, #tpu.memory_space<vmem>>, vector<8x32xf32>
    %94 = vector.broadcast %9 : vector<1x32xf32> to vector<8x32xf32>
    %95 = arith.addf %75, %94 : vector<8x32xf32>
    %96 = arith.mulf %83, %95 : vector<8x32xf32>
    %97 = arith.addf %93, %96 : vector<8x32xf32>
    %98 = math.tanh %97 : vector<8x32xf32>
    %cst_59 = arith.constant 1.000000e+00 : f32
    %99 = vector.broadcast %cst_59 : f32 to vector<8x32xf32>
    %100 = arith.subf %99, %91 : vector<8x32xf32>
    %101 = arith.mulf %100, %98 : vector<8x32xf32>
    %102 = arith.mulf %91, %68 : vector<8x32xf32>
    %103 = arith.addf %101, %102 : vector<8x32xf32>
    %104 = arith.index_cast %72 : i32 to index
    %c0_60 = arith.constant 0 : index
    %105 = vector.load %arg6[%104, %c0_60] : memref<64x32xf32, #tpu.memory_space<vmem>>, vector<8x32xf32>
    tpu.vector_store %arg6[%104, %c0_60], %103 {strides = array<i32>} : memref<64x32xf32, #tpu.memory_space<vmem>>, vector<8x32xf32>,
    %c2_i32 = arith.constant 2 : i32
    %c8_i32_61 = arith.constant 8 : i32
    %106 = arith.muli %c2_i32, %c8_i32_61 : i32
    %107 = tpu.assume_multiple %106, 8 : i32
    %cst_62 = arith.constant dense<0.000000e+00> : vector<8x32xf32>
    %108 = tpu.matmul %103, %4, %cst_62 {dimension_numbers = #tpu.dot_dimension_numbers<[1], [0], [0], [1], [0, 0, 1, 1], [], []>} : vector<8x32xf32>, vector<32x32xf32>, vector<8x32xf32> -> vector<8x32xf32>
    %cst_63 = arith.constant dense<0.000000e+00> : vector<8x32xf32>
    %109 = tpu.matmul %103, %6, %cst_63 {dimension_numbers = #tpu.dot_dimension_numbers<[1], [0], [0], [1], [0, 0, 1, 1], [], []>} : vector<8x32xf32>, vector<32x32xf32>, vector<8x32xf32> -> vector<8x32xf32>
    %cst_64 = arith.constant dense<0.000000e+00> : vector<8x32xf32>
    %110 = tpu.matmul %103, %8, %cst_64 {dimension_numbers = #tpu.dot_dimension_numbers<[1], [0], [0], [1], [0, 0, 1, 1], [], []>} : vector<8x32xf32>, vector<32x32xf32>, vector<8x32xf32> -> vector<8x32xf32>
    %111 = arith.index_cast %107 : i32 to index
    %c0_65 = arith.constant 0 : index
    %112 = vector.load %arg7[%111, %c0_65] : memref<64x32xf32, #tpu.memory_space<vmem>>, vector<8x32xf32>
    %113 = arith.addf %112, %108 : vector<8x32xf32>
    %114 = arith.negf %113 : vector<8x32xf32>
    %115 = math.exp %114 : vector<8x32xf32>
    %cst_66 = arith.constant 1.000000e+00 : f32
    %116 = vector.broadcast %cst_66 : f32 to vector<8x32xf32>
    %117 = arith.addf %116, %115 : vector<8x32xf32>
    %118 = arith.divf %116, %117 : vector<8x32xf32>
    %119 = arith.index_cast %107 : i32 to index
    %c0_67 = arith.constant 0 : index
    %120 = vector.load %arg8[%119, %c0_67] : memref<64x32xf32, #tpu.memory_space<vmem>>, vector<8x32xf32>
    %121 = arith.addf %120, %109 : vector<8x32xf32>
    %122 = arith.negf %121 : vector<8x32xf32>
    %123 = math.exp %122 : vector<8x32xf32>
    %cst_68 = arith.constant 1.000000e+00 : f32
    %124 = vector.broadcast %cst_68 : f32 to vector<8x32xf32>
    %125 = arith.addf %124, %123 : vector<8x32xf32>
    %126 = arith.divf %124, %125 : vector<8x32xf32>
    %127 = arith.index_cast %107 : i32 to index
    %c0_69 = arith.constant 0 : index
    %128 = vector.load %arg9[%127, %c0_69] : memref<64x32xf32, #tpu.memory_space<vmem>>, vector<8x32xf32>
    %129 = vector.broadcast %9 : vector<1x32xf32> to vector<8x32xf32>
    %130 = arith.addf %110, %129 : vector<8x32xf32>
    %131 = arith.mulf %118, %130 : vector<8x32xf32>
    %132 = arith.addf %128, %131 : vector<8x32xf32>
    %133 = math.tanh %132 : vector<8x32xf32>
    %cst_70 = arith.constant 1.000000e+00 : f32
    %134 = vector.broadcast %cst_70 : f32 to vector<8x32xf32>
    %135 = arith.subf %134, %126 : vector<8x32xf32>
    %136 = arith.mulf %135, %133 : vector<8x32xf32>
    %137 = arith.mulf %126, %103 : vector<8x32xf32>
    %138 = arith.addf %136, %137 : vector<8x32xf32>
    %139 = arith.index_cast %107 : i32 to index
    %c0_71 = arith.constant 0 : index
    %140 = vector.load %arg6[%139, %c0_71] : memref<64x32xf32, #tpu.memory_space<vmem>>, vector<8x32xf32>
    tpu.vector_store %arg6[%139, %c0_71], %138 {strides = array<i32>} : memref<64x32xf32, #tpu.memory_space<vmem>>, vector<8x32xf32>,
    %c3_i32 = arith.constant 3 : i32
    %c8_i32_72 = arith.constant 8 : i32
    %141 = arith.muli %c3_i32, %c8_i32_72 : i32
    %142 = tpu.assume_multiple %141, 8 : i32
    %cst_73 = arith.constant dense<0.000000e+00> : vector<8x32xf32>
    %143 = tpu.matmul %138, %4, %cst_73 {dimension_numbers = #tpu.dot_dimension_numbers<[1], [0], [0], [1], [0, 0, 1, 1], [], []>} : vector<8x32xf32>, vector<32x32xf32>, vector<8x32xf32> -> vector<8x32xf32>
    %cst_74 = arith.constant dense<0.000000e+00> : vector<8x32xf32>
    %144 = tpu.matmul %138, %6, %cst_74 {dimension_numbers = #tpu.dot_dimension_numbers<[1], [0], [0], [1], [0, 0, 1, 1], [], []>} : vector<8x32xf32>, vector<32x32xf32>, vector<8x32xf32> -> vector<8x32xf32>
    %cst_75 = arith.constant dense<0.000000e+00> : vector<8x32xf32>
    %145 = tpu.matmul %138, %8, %cst_75 {dimension_numbers = #tpu.dot_dimension_numbers<[1], [0], [0], [1], [0, 0, 1, 1], [], []>} : vector<8x32xf32>, vector<32x32xf32>, vector<8x32xf32> -> vector<8x32xf32>
    %146 = arith.index_cast %142 : i32 to index
    %c0_76 = arith.constant 0 : index
    %147 = vector.load %arg7[%146, %c0_76] : memref<64x32xf32, #tpu.memory_space<vmem>>, vector<8x32xf32>
    %148 = arith.addf %147, %143 : vector<8x32xf32>
    %149 = arith.negf %148 : vector<8x32xf32>
    %150 = math.exp %149 : vector<8x32xf32>
    %cst_77 = arith.constant 1.000000e+00 : f32
    %151 = vector.broadcast %cst_77 : f32 to vector<8x32xf32>
    %152 = arith.addf %151, %150 : vector<8x32xf32>
    %153 = arith.divf %151, %152 : vector<8x32xf32>
    %154 = arith.index_cast %142 : i32 to index
    %c0_78 = arith.constant 0 : index
    %155 = vector.load %arg8[%154, %c0_78] : memref<64x32xf32, #tpu.memory_space<vmem>>, vector<8x32xf32>
    %156 = arith.addf %155, %144 : vector<8x32xf32>
    %157 = arith.negf %156 : vector<8x32xf32>
    %158 = math.exp %157 : vector<8x32xf32>
    %cst_79 = arith.constant 1.000000e+00 : f32
    %159 = vector.broadcast %cst_79 : f32 to vector<8x32xf32>
    %160 = arith.addf %159, %158 : vector<8x32xf32>
    %161 = arith.divf %159, %160 : vector<8x32xf32>
    %162 = arith.index_cast %142 : i32 to index
    %c0_80 = arith.constant 0 : index
    %163 = vector.load %arg9[%162, %c0_80] : memref<64x32xf32, #tpu.memory_space<vmem>>, vector<8x32xf32>
    %164 = vector.broadcast %9 : vector<1x32xf32> to vector<8x32xf32>
    %165 = arith.addf %145, %164 : vector<8x32xf32>
    %166 = arith.mulf %153, %165 : vector<8x32xf32>
    %167 = arith.addf %163, %166 : vector<8x32xf32>
    %168 = math.tanh %167 : vector<8x32xf32>
    %cst_81 = arith.constant 1.000000e+00 : f32
    %169 = vector.broadcast %cst_81 : f32 to vector<8x32xf32>
    %170 = arith.subf %169, %161 : vector<8x32xf32>
    %171 = arith.mulf %170, %168 : vector<8x32xf32>
    %172 = arith.mulf %161, %138 : vector<8x32xf32>
    %173 = arith.addf %171, %172 : vector<8x32xf32>
    %174 = arith.index_cast %142 : i32 to index
    %c0_82 = arith.constant 0 : index
    %175 = vector.load %arg6[%174, %c0_82] : memref<64x32xf32, #tpu.memory_space<vmem>>, vector<8x32xf32>
    tpu.vector_store %arg6[%174, %c0_82], %173 {strides = array<i32>} : memref<64x32xf32, #tpu.memory_space<vmem>>, vector<8x32xf32>,
    %c4_i32 = arith.constant 4 : i32
    %c8_i32_83 = arith.constant 8 : i32
    %176 = arith.muli %c4_i32, %c8_i32_83 : i32
    %177 = tpu.assume_multiple %176, 8 : i32
    %cst_84 = arith.constant dense<0.000000e+00> : vector<8x32xf32>
    %178 = tpu.matmul %173, %4, %cst_84 {dimension_numbers = #tpu.dot_dimension_numbers<[1], [0], [0], [1], [0, 0, 1, 1], [], []>} : vector<8x32xf32>, vector<32x32xf32>, vector<8x32xf32> -> vector<8x32xf32>
    %cst_85 = arith.constant dense<0.000000e+00> : vector<8x32xf32>
    %179 = tpu.matmul %173, %6, %cst_85 {dimension_numbers = #tpu.dot_dimension_numbers<[1], [0], [0], [1], [0, 0, 1, 1], [], []>} : vector<8x32xf32>, vector<32x32xf32>, vector<8x32xf32> -> vector<8x32xf32>
    %cst_86 = arith.constant dense<0.000000e+00> : vector<8x32xf32>
    %180 = tpu.matmul %173, %8, %cst_86 {dimension_numbers = #tpu.dot_dimension_numbers<[1], [0], [0], [1], [0, 0, 1, 1], [], []>} : vector<8x32xf32>, vector<32x32xf32>, vector<8x32xf32> -> vector<8x32xf32>
    %181 = arith.index_cast %177 : i32 to index
    %c0_87 = arith.constant 0 : index
    %182 = vector.load %arg7[%181, %c0_87] : memref<64x32xf32, #tpu.memory_space<vmem>>, vector<8x32xf32>
    %183 = arith.addf %182, %178 : vector<8x32xf32>
    %184 = arith.negf %183 : vector<8x32xf32>
    %185 = math.exp %184 : vector<8x32xf32>
    %cst_88 = arith.constant 1.000000e+00 : f32
    %186 = vector.broadcast %cst_88 : f32 to vector<8x32xf32>
    %187 = arith.addf %186, %185 : vector<8x32xf32>
    %188 = arith.divf %186, %187 : vector<8x32xf32>
    %189 = arith.index_cast %177 : i32 to index
    %c0_89 = arith.constant 0 : index
    %190 = vector.load %arg8[%189, %c0_89] : memref<64x32xf32, #tpu.memory_space<vmem>>, vector<8x32xf32>
    %191 = arith.addf %190, %179 : vector<8x32xf32>
    %192 = arith.negf %191 : vector<8x32xf32>
    %193 = math.exp %192 : vector<8x32xf32>
    %cst_90 = arith.constant 1.000000e+00 : f32
    %194 = vector.broadcast %cst_90 : f32 to vector<8x32xf32>
    %195 = arith.addf %194, %193 : vector<8x32xf32>
    %196 = arith.divf %194, %195 : vector<8x32xf32>
    %197 = arith.index_cast %177 : i32 to index
    %c0_91 = arith.constant 0 : index
    %198 = vector.load %arg9[%197, %c0_91] : memref<64x32xf32, #tpu.memory_space<vmem>>, vector<8x32xf32>
    %199 = vector.broadcast %9 : vector<1x32xf32> to vector<8x32xf32>
    %200 = arith.addf %180, %199 : vector<8x32xf32>
    %201 = arith.mulf %188, %200 : vector<8x32xf32>
    %202 = arith.addf %198, %201 : vector<8x32xf32>
    %203 = math.tanh %202 : vector<8x32xf32>
    %cst_92 = arith.constant 1.000000e+00 : f32
    %204 = vector.broadcast %cst_92 : f32 to vector<8x32xf32>
    %205 = arith.subf %204, %196 : vector<8x32xf32>
    %206 = arith.mulf %205, %203 : vector<8x32xf32>
    %207 = arith.mulf %196, %173 : vector<8x32xf32>
    %208 = arith.addf %206, %207 : vector<8x32xf32>
    %209 = arith.index_cast %177 : i32 to index
    %c0_93 = arith.constant 0 : index
    %210 = vector.load %arg6[%209, %c0_93] : memref<64x32xf32, #tpu.memory_space<vmem>>, vector<8x32xf32>
    tpu.vector_store %arg6[%209, %c0_93], %208 {strides = array<i32>} : memref<64x32xf32, #tpu.memory_space<vmem>>, vector<8x32xf32>,
    %c5_i32 = arith.constant 5 : i32
    %c8_i32_94 = arith.constant 8 : i32
    %211 = arith.muli %c5_i32, %c8_i32_94 : i32
    %212 = tpu.assume_multiple %211, 8 : i32
    %cst_95 = arith.constant dense<0.000000e+00> : vector<8x32xf32>
    %213 = tpu.matmul %208, %4, %cst_95 {dimension_numbers = #tpu.dot_dimension_numbers<[1], [0], [0], [1], [0, 0, 1, 1], [], []>} : vector<8x32xf32>, vector<32x32xf32>, vector<8x32xf32> -> vector<8x32xf32>
    %cst_96 = arith.constant dense<0.000000e+00> : vector<8x32xf32>
    %214 = tpu.matmul %208, %6, %cst_96 {dimension_numbers = #tpu.dot_dimension_numbers<[1], [0], [0], [1], [0, 0, 1, 1], [], []>} : vector<8x32xf32>, vector<32x32xf32>, vector<8x32xf32> -> vector<8x32xf32>
    %cst_97 = arith.constant dense<0.000000e+00> : vector<8x32xf32>
    %215 = tpu.matmul %208, %8, %cst_97 {dimension_numbers = #tpu.dot_dimension_numbers<[1], [0], [0], [1], [0, 0, 1, 1], [], []>} : vector<8x32xf32>, vector<32x32xf32>, vector<8x32xf32> -> vector<8x32xf32>
    %216 = arith.index_cast %212 : i32 to index
    %c0_98 = arith.constant 0 : index
    %217 = vector.load %arg7[%216, %c0_98] : memref<64x32xf32, #tpu.memory_space<vmem>>, vector<8x32xf32>
    %218 = arith.addf %217, %213 : vector<8x32xf32>
    %219 = arith.negf %218 : vector<8x32xf32>
    %220 = math.exp %219 : vector<8x32xf32>
    %cst_99 = arith.constant 1.000000e+00 : f32
    %221 = vector.broadcast %cst_99 : f32 to vector<8x32xf32>
    %222 = arith.addf %221, %220 : vector<8x32xf32>
    %223 = arith.divf %221, %222 : vector<8x32xf32>
    %224 = arith.index_cast %212 : i32 to index
    %c0_100 = arith.constant 0 : index
    %225 = vector.load %arg8[%224, %c0_100] : memref<64x32xf32, #tpu.memory_space<vmem>>, vector<8x32xf32>
    %226 = arith.addf %225, %214 : vector<8x32xf32>
    %227 = arith.negf %226 : vector<8x32xf32>
    %228 = math.exp %227 : vector<8x32xf32>
    %cst_101 = arith.constant 1.000000e+00 : f32
    %229 = vector.broadcast %cst_101 : f32 to vector<8x32xf32>
    %230 = arith.addf %229, %228 : vector<8x32xf32>
    %231 = arith.divf %229, %230 : vector<8x32xf32>
    %232 = arith.index_cast %212 : i32 to index
    %c0_102 = arith.constant 0 : index
    %233 = vector.load %arg9[%232, %c0_102] : memref<64x32xf32, #tpu.memory_space<vmem>>, vector<8x32xf32>
    %234 = vector.broadcast %9 : vector<1x32xf32> to vector<8x32xf32>
    %235 = arith.addf %215, %234 : vector<8x32xf32>
    %236 = arith.mulf %223, %235 : vector<8x32xf32>
    %237 = arith.addf %233, %236 : vector<8x32xf32>
    %238 = math.tanh %237 : vector<8x32xf32>
    %cst_103 = arith.constant 1.000000e+00 : f32
    %239 = vector.broadcast %cst_103 : f32 to vector<8x32xf32>
    %240 = arith.subf %239, %231 : vector<8x32xf32>
    %241 = arith.mulf %240, %238 : vector<8x32xf32>
    %242 = arith.mulf %231, %208 : vector<8x32xf32>
    %243 = arith.addf %241, %242 : vector<8x32xf32>
    %244 = arith.index_cast %212 : i32 to index
    %c0_104 = arith.constant 0 : index
    %245 = vector.load %arg6[%244, %c0_104] : memref<64x32xf32, #tpu.memory_space<vmem>>, vector<8x32xf32>
    tpu.vector_store %arg6[%244, %c0_104], %243 {strides = array<i32>} : memref<64x32xf32, #tpu.memory_space<vmem>>, vector<8x32xf32>,
    %c6_i32 = arith.constant 6 : i32
    %c8_i32_105 = arith.constant 8 : i32
    %246 = arith.muli %c6_i32, %c8_i32_105 : i32
    %247 = tpu.assume_multiple %246, 8 : i32
    %cst_106 = arith.constant dense<0.000000e+00> : vector<8x32xf32>
    %248 = tpu.matmul %243, %4, %cst_106 {dimension_numbers = #tpu.dot_dimension_numbers<[1], [0], [0], [1], [0, 0, 1, 1], [], []>} : vector<8x32xf32>, vector<32x32xf32>, vector<8x32xf32> -> vector<8x32xf32>
    %cst_107 = arith.constant dense<0.000000e+00> : vector<8x32xf32>
    %249 = tpu.matmul %243, %6, %cst_107 {dimension_numbers = #tpu.dot_dimension_numbers<[1], [0], [0], [1], [0, 0, 1, 1], [], []>} : vector<8x32xf32>, vector<32x32xf32>, vector<8x32xf32> -> vector<8x32xf32>
    %cst_108 = arith.constant dense<0.000000e+00> : vector<8x32xf32>
    %250 = tpu.matmul %243, %8, %cst_108 {dimension_numbers = #tpu.dot_dimension_numbers<[1], [0], [0], [1], [0, 0, 1, 1], [], []>} : vector<8x32xf32>, vector<32x32xf32>, vector<8x32xf32> -> vector<8x32xf32>
    %251 = arith.index_cast %247 : i32 to index
    %c0_109 = arith.constant 0 : index
    %252 = vector.load %arg7[%251, %c0_109] : memref<64x32xf32, #tpu.memory_space<vmem>>, vector<8x32xf32>
    %253 = arith.addf %252, %248 : vector<8x32xf32>
    %254 = arith.negf %253 : vector<8x32xf32>
    %255 = math.exp %254 : vector<8x32xf32>
    %cst_110 = arith.constant 1.000000e+00 : f32
    %256 = vector.broadcast %cst_110 : f32 to vector<8x32xf32>
    %257 = arith.addf %256, %255 : vector<8x32xf32>
    %258 = arith.divf %256, %257 : vector<8x32xf32>
    %259 = arith.index_cast %247 : i32 to index
    %c0_111 = arith.constant 0 : index
    %260 = vector.load %arg8[%259, %c0_111] : memref<64x32xf32, #tpu.memory_space<vmem>>, vector<8x32xf32>
    %261 = arith.addf %260, %249 : vector<8x32xf32>
    %262 = arith.negf %261 : vector<8x32xf32>
    %263 = math.exp %262 : vector<8x32xf32>
    %cst_112 = arith.constant 1.000000e+00 : f32
    %264 = vector.broadcast %cst_112 : f32 to vector<8x32xf32>
    %265 = arith.addf %264, %263 : vector<8x32xf32>
    %266 = arith.divf %264, %265 : vector<8x32xf32>
    %267 = arith.index_cast %247 : i32 to index
    %c0_113 = arith.constant 0 : index
    %268 = vector.load %arg9[%267, %c0_113] : memref<64x32xf32, #tpu.memory_space<vmem>>, vector<8x32xf32>
    %269 = vector.broadcast %9 : vector<1x32xf32> to vector<8x32xf32>
    %270 = arith.addf %250, %269 : vector<8x32xf32>
    %271 = arith.mulf %258, %270 : vector<8x32xf32>
    %272 = arith.addf %268, %271 : vector<8x32xf32>
    %273 = math.tanh %272 : vector<8x32xf32>
    %cst_114 = arith.constant 1.000000e+00 : f32
    %274 = vector.broadcast %cst_114 : f32 to vector<8x32xf32>
    %275 = arith.subf %274, %266 : vector<8x32xf32>
    %276 = arith.mulf %275, %273 : vector<8x32xf32>
    %277 = arith.mulf %266, %243 : vector<8x32xf32>
    %278 = arith.addf %276, %277 : vector<8x32xf32>
    %279 = arith.index_cast %247 : i32 to index
    %c0_115 = arith.constant 0 : index
    %280 = vector.load %arg6[%279, %c0_115] : memref<64x32xf32, #tpu.memory_space<vmem>>, vector<8x32xf32>
    tpu.vector_store %arg6[%279, %c0_115], %278 {strides = array<i32>} : memref<64x32xf32, #tpu.memory_space<vmem>>, vector<8x32xf32>,
    %c7_i32 = arith.constant 7 : i32
    %c8_i32_116 = arith.constant 8 : i32
    %281 = arith.muli %c7_i32, %c8_i32_116 : i32
    %282 = tpu.assume_multiple %281, 8 : i32
    %cst_117 = arith.constant dense<0.000000e+00> : vector<8x32xf32>
    %283 = tpu.matmul %278, %4, %cst_117 {dimension_numbers = #tpu.dot_dimension_numbers<[1], [0], [0], [1], [0, 0, 1, 1], [], []>} : vector<8x32xf32>, vector<32x32xf32>, vector<8x32xf32> -> vector<8x32xf32>
    %cst_118 = arith.constant dense<0.000000e+00> : vector<8x32xf32>
    %284 = tpu.matmul %278, %6, %cst_118 {dimension_numbers = #tpu.dot_dimension_numbers<[1], [0], [0], [1], [0, 0, 1, 1], [], []>} : vector<8x32xf32>, vector<32x32xf32>, vector<8x32xf32> -> vector<8x32xf32>
    %cst_119 = arith.constant dense<0.000000e+00> : vector<8x32xf32>
    %285 = tpu.matmul %278, %8, %cst_119 {dimension_numbers = #tpu.dot_dimension_numbers<[1], [0], [0], [1], [0, 0, 1, 1], [], []>} : vector<8x32xf32>, vector<32x32xf32>, vector<8x32xf32> -> vector<8x32xf32>
    %286 = arith.index_cast %282 : i32 to index
    %c0_120 = arith.constant 0 : index
    %287 = vector.load %arg7[%286, %c0_120] : memref<64x32xf32, #tpu.memory_space<vmem>>, vector<8x32xf32>
    %288 = arith.addf %287, %283 : vector<8x32xf32>
    %289 = arith.negf %288 : vector<8x32xf32>
    %290 = math.exp %289 : vector<8x32xf32>
    %cst_121 = arith.constant 1.000000e+00 : f32
    %291 = vector.broadcast %cst_121 : f32 to vector<8x32xf32>
    %292 = arith.addf %291, %290 : vector<8x32xf32>
    %293 = arith.divf %291, %292 : vector<8x32xf32>
    %294 = arith.index_cast %282 : i32 to index
    %c0_122 = arith.constant 0 : index
    %295 = vector.load %arg8[%294, %c0_122] : memref<64x32xf32, #tpu.memory_space<vmem>>, vector<8x32xf32>
    %296 = arith.addf %295, %284 : vector<8x32xf32>
    %297 = arith.negf %296 : vector<8x32xf32>
    %298 = math.exp %297 : vector<8x32xf32>
    %cst_123 = arith.constant 1.000000e+00 : f32
    %299 = vector.broadcast %cst_123 : f32 to vector<8x32xf32>
    %300 = arith.addf %299, %298 : vector<8x32xf32>
    %301 = arith.divf %299, %300 : vector<8x32xf32>
    %302 = arith.index_cast %282 : i32 to index
    %c0_124 = arith.constant 0 : index
    %303 = vector.load %arg9[%302, %c0_124] : memref<64x32xf32, #tpu.memory_space<vmem>>, vector<8x32xf32>
    %304 = vector.broadcast %9 : vector<1x32xf32> to vector<8x32xf32>
    %305 = arith.addf %285, %304 : vector<8x32xf32>
    %306 = arith.mulf %293, %305 : vector<8x32xf32>
    %307 = arith.addf %303, %306 : vector<8x32xf32>
    %308 = math.tanh %307 : vector<8x32xf32>
    %cst_125 = arith.constant 1.000000e+00 : f32
    %309 = vector.broadcast %cst_125 : f32 to vector<8x32xf32>
    %310 = arith.subf %309, %301 : vector<8x32xf32>
    %311 = arith.mulf %310, %308 : vector<8x32xf32>
    %312 = arith.mulf %301, %278 : vector<8x32xf32>
    %313 = arith.addf %311, %312 : vector<8x32xf32>
    %314 = arith.index_cast %282 : i32 to index
    %c0_126 = arith.constant 0 : index
    %315 = vector.load %arg6[%314, %c0_126] : memref<64x32xf32, #tpu.memory_space<vmem>>, vector<8x32xf32>
    tpu.vector_store %arg6[%314, %c0_126], %313 {strides = array<i32>} : memref<64x32xf32, #tpu.memory_space<vmem>>, vector<8x32xf32>,
    %c8_i32_127 = arith.constant 8 : i32
    %c0_128 = arith.constant 0 : index
    %c0_129 = arith.constant 0 : index
    %316 = vector.load %arg10[%c0_128, %c0_129] : memref<8x32xf32, #tpu.memory_space<vmem>>, vector<8x32xf32>
    tpu.vector_store %arg10[%c0_128, %c0_129], %313 {strides = array<i32>} : memref<8x32xf32, #tpu.memory_space<vmem>>, vector<8x32xf32>,
    return
  }
  func.func @transform_0(%arg0: i32) -> (i32, i32) {
    %c0_i32 = arith.constant 0 : i32
    %c0_i32_0 = arith.constant 0 : i32
    return %arg0, %c0_i32 : i32, i32
  }
  func.func @transform_1(%arg0: i32) -> (i32, i32, i32) {
    %c0_i32 = arith.constant 0 : i32
    %c0_i32_0 = arith.constant 0 : i32
    %c0_i32_1 = arith.constant 0 : i32
    %c0_i32_2 = arith.constant 0 : i32
    return %c0_i32, %c0_i32_0, %c0_i32_1 : i32, i32, i32
  }
  func.func @transform_2(%arg0: i32) -> (i32, i32, i32) {
    %c0_i32 = arith.constant 0 : i32
    %c0_i32_0 = arith.constant 0 : i32
    %c0_i32_1 = arith.constant 0 : i32
    %c0_i32_2 = arith.constant 0 : i32
    return %c0_i32, %c0_i32_0, %c0_i32_1 : i32, i32, i32
  }
  func.func @transform_3(%arg0: i32) -> (i32, i32, i32) {
    %c0_i32 = arith.constant 0 : i32
    %c0_i32_0 = arith.constant 0 : i32
    %c0_i32_1 = arith.constant 0 : i32
    %c0_i32_2 = arith.constant 0 : i32
    return %c0_i32, %c0_i32_0, %c0_i32_1 : i32, i32, i32
  }
  func.func @transform_4(%arg0: i32) -> (i32, i32) {
    %c0_i32 = arith.constant 0 : i32
    %c0_i32_0 = arith.constant 0 : i32
    %c0_i32_1 = arith.constant 0 : i32
    return %c0_i32, %c0_i32_0 : i32, i32
  }
  func.func @transform_5(%arg0: i32) -> (i32, i32) {
    %c0_i32 = arith.constant 0 : i32
    %c0_i32_0 = arith.constant 0 : i32
    return %arg0, %c0_i32 : i32, i32
  }
}

</mosaic_0001>

<llo_original>
// kernel: tpu_custom_call.1
$region0: #{tpu_custom_call.1}
  #allocation0 [shape = 'u32[]', space=smem, size = 0x4, offset = 0x4, fixed_abs, tag = 'smem constant byte address 0x4 - core index']
  #allocation1 [shape = 'u32[144,128]{1,0:T(1,128)}', space=vmem, size = 0x12000, scoped, tag = 'internal scratch']
  #allocation2 [shape = 'f32[64,32]{1,0:T(8,128)}', space=vmem, size = 0x8000, scoped, tag = 'scratch operand']
  #allocation3 [shape = 'f32[64,32]{1,0:T(8,128)}', space=vmem, size = 0x8000, scoped, tag = 'scratch operand']
  #allocation4 [shape = 'f32[64,32]{1,0:T(8,128)}', space=vmem, size = 0x8000, scoped, tag = 'scratch operand']
  #allocation5 [shape = 'f32[8,32]{1,0:T(8,128)}', space=vmem, size = 0x1000, scoped, tag = 'scratch operand']
  %s0 = inlined_call_operand.vmem [shape: f32[64,32], index: 0, kind: input, shape index: {}]
  %s1 = inlined_call_operand.vmem [shape: f32[3,32,32], index: 1, kind: input, shape index: {}]
  %s2 = inlined_call_operand.hbm [shape: f32[3,32,32], index: 2, kind: input, shape index: {}]
  %s3 = inlined_call_operand.vmem [shape: f32[3,1,32], index: 3, kind: input, shape index: {}]
  %s4 = inlined_call_operand.vmem [shape: f32[1,32], index: 4, kind: input, shape index: {}]
  %s5 = inlined_call_operand.vmem [shape: f32[64,32], index: 5, kind: output, shape index: {}]
  %s6 = sld [smem:[#allocation0]]
  $region38: #{tpu_custom_call.1} parent=0
    _
  %s8 = ssub.s32 1, %s6
  %s9 = scalar_select 0, %s8, %s6
  $region1: #{tpu_custom_call.1} parent=0
    #allocation6 [shape = 'u8[49152]{0}', space=vmem, size = 0xc000, scoped, tag = 'input window, operand 2, single buffered']
    #allocation7 [shape = 's32[1]{0}', space=sflag, size = 0x4, scoped, tag = 'scoped memory for tpu_custom_call.1']
    %10 = vsyncpa [#allocation7], 0
    // Predicated region
    $region2: #{tpu_custom_call.1} parent=1 // pred_check
      _
    $region3: #{tpu_custom_call.1} parent=1 // pred_check_branch
      %12 = sbr.rel (0) target = $region5
    $region4: #{tpu_custom_call.1} parent=1 // pred_region
      _
    $region5: #{tpu_custom_call.1} parent=1 // pred_fallthru
      _
    // Predicated region
    $region6: #{tpu_custom_call.1} parent=1 // pred_check
      _
    $region7: #{tpu_custom_call.1} parent=1 // pred_check_branch
      %14 = sbr.rel (0) target = $region9
    $region8: #{tpu_custom_call.1} parent=1 // pred_region
      _
    $region9: #{tpu_custom_call.1} parent=1 // pred_fallthru
      _
    // Predicated region
    $region10: #{tpu_custom_call.1} parent=1 // pred_check
      _
    $region11: #{tpu_custom_call.1} parent=1 // pred_check_branch
      %16 = sbr.rel (0) target = $region13
    $region12: #{tpu_custom_call.1} parent=1 // pred_region
      %s18 = ssub.s32 1536, 1536
      %19 = vsyncadd [#allocation7], %s18
      %s20 = sshll.u32 [#allocation6], 4
      %s21 = int_to_ptr.vmem [resolvable:$true] %s20
      %26 = dma.hbm_to_vmem [thread:$0]  %s2, 1536, %s21, [#allocation7], 128, 128, 8
    $region13: #{tpu_custom_call.1} parent=1 // pred_fallthru
      _
    // Predicated region
    $region14: #{tpu_custom_call.1} parent=1 // pred_check
      _
    $region15: #{tpu_custom_call.1} parent=1 // pred_check_branch
      %28 = sbr.rel (0) target = $region17
    $region16: #{tpu_custom_call.1} parent=1 // pred_region
      _
    $region17: #{tpu_custom_call.1} parent=1 // pred_fallthru
      _
    // Predicated region
    $region18: #{tpu_custom_call.1} parent=1 // pred_check
      _
    $region19: #{tpu_custom_call.1} parent=1 // pred_check_branch
      %30 = sbr.rel (0) target = $region21
    $region20: #{tpu_custom_call.1} parent=1 // pred_region
      _
    $region21: #{tpu_custom_call.1} parent=1 // pred_fallthru
      _
    // Predicated region
    $region22: #{tpu_custom_call.1} parent=1 // pred_check
      _
    $region23: #{tpu_custom_call.1} parent=1 // pred_check_branch
      %32 = sbr.rel (0) target = $region25
    $region24: #{tpu_custom_call.1} parent=1 // pred_region
      %33 = dma.done [#allocation7], 1536
    $region25: #{tpu_custom_call.1} parent=1 // pred_fallthru
      _
    %p34 = scmp.eq.s32.totalorder 0, 0
    // Predicated region
    $region26: #{tpu_custom_call.1} parent=1 // pred_check
      %p35 = pneg %p34
    $region27: #{tpu_custom_call.1} parent=1 // pred_check_branch
      %37 = sbr.rel (%p35) target = $region29
    $region28: #{tpu_custom_call.1} parent=1 // pred_region
      %vm38 = vcmask 261120
      %39 = vst.msk [vmem:[#allocation5] sm:$0xff] %vm38, 0.0
    $region29: #{tpu_custom_call.1} parent=1 // pred_fallthru
      _
    %v40 = vld [vmem:[#allocation6] sm:$0xff]
    %v41 = vld [vmem:[#allocation6 + $0x8] sm:$0xff]
    %v42 = vld [vmem:[#allocation6 + $0x10] sm:$0xff]
    %v43 = vld [vmem:[#allocation6 + $0x18] sm:$0xff]
    %s44 = scalar_lea.vmem [#allocation6], 32
    %v45 = vld [vmem:[%s44] sm:$0xff]
    %v46 = vld [vmem:[%s44 + $0x8] sm:$0xff]
    %v47 = vld [vmem:[%s44 + $0x10] sm:$0xff]
    %v48 = vld [vmem:[%s44 + $0x18] sm:$0xff]
    %s49 = scalar_lea.vmem [#allocation6], 64
    %v50 = vld [vmem:[%s49] sm:$0xff]
    %v51 = vld [vmem:[%s49 + $0x8] sm:$0xff]
    %v52 = vld [vmem:[%s49 + $0x10] sm:$0xff]
    %v53 = vld [vmem:[%s49 + $0x18] sm:$0xff]
    %v54 = vld [vmem:[%s4] sm:$0x1]
    %v55 = vld [vmem:[%s0] sm:$0xff]
    %v56 = vld [vmem:[%s0 + $0x8] sm:$0xff]
    %v57 = vld [vmem:[%s0 + $0x10] sm:$0xff]
    %v58 = vld [vmem:[%s0 + $0x18] sm:$0xff]
    %v59 = vld [vmem:[%s0 + $0x20] sm:$0xff]
    %v60 = vld [vmem:[%s0 + $0x28] sm:$0xff]
    %v61 = vld [vmem:[%s0 + $0x30] sm:$0xff]
    %v62 = vld [vmem:[%s0 + $0x38] sm:$0xff]
    %v63 = vld [vmem:[%s1] sm:$0xff]
    %v64 = vld [vmem:[%s1 + $0x8] sm:$0xff]
    %v65 = vld [vmem:[%s1 + $0x10] sm:$0xff]
    %v66 = vld [vmem:[%s1 + $0x18] sm:$0xff]
    %v67 = vld [vmem:[%s3] sm:$0x1]
    %v69 = vlaneseq
    %v70 = vshrl.u32 %v69, 7
    %v71 = vsub.s32 0, %v70
    %v72 = vrot.slane %v67, %v71
    %vm74 = vcmask 261120
    %v76 = vsel %vm74, %v55, 0
    %v79 = vsel %vm74, %v56, 0
    %v82 = vsel %vm74, %v57, 0
    %v85 = vsel %vm74, %v58, 0
    %v88 = vsel %vm74, %v59, 0
    %v91 = vsel %vm74, %v60, 0
    %v94 = vsel %vm74, %v61, 0
    %v97 = vsel %vm74, %v62, 0
    %99 = vmatprep.subr.mxu0 0.0
    %100 = vmatpush1.msra.mxu0 0.0
    %101 = vmatprep.subr.mxu0 0.0
    %102 = vmatpush1.msra.mxu0 0.0
    %103 = vmatprep.subr.mxu0 0.0
    %104 = vmatpush1.msra.mxu0 0.0
    %105 = vmatprep.subr.mxu0 0.0
    %106 = vmatpush1.msra.mxu0 0.0
    %107 = vmatprep.subr.mxu0 0.0
    %108 = vmatpush1.msra.mxu0 0.0
    %109 = vmatprep.subr.mxu0 0.0
    %110 = vmatpush1.msra.mxu0 0.0
    %111 = vmatprep.subr.mxu0 0.0
    %112 = vmatpush1.msra.mxu0 0.0
    %113 = vmatprep.subr.mxu0 0.0
    %114 = vmatpush1.msra.mxu0 0.0
    %115 = vmatprep.subr.mxu0 0.0
    %116 = vmatpush1.msra.mxu0 0.0
    %117 = vmatprep.subr.mxu0 0.0
    %118 = vmatpush1.msra.mxu0 0.0
    %119 = vmatprep.subr.mxu0 0.0
    %120 = vmatpush1.msra.mxu0 0.0
    %121 = vmatprep.subr.mxu0 0.0
    %122 = vmatpush1.msra.mxu0 0.0
    %123 = vmatprep.subr.mxu0 0.0
    %124 = vmatpush1.msra.mxu0 %v66
    %125 = vmatprep.subr.mxu0 0.0
    %126 = vmatpush1.msra.mxu0 %v65
    %127 = vmatprep.subr.mxu0 0.0
    %128 = vmatpush1.msra.mxu0 %v64
    %129 = vmatprep.subr.mxu0 0.0
    %130 = vmatpush1.msra.mxu0 %v63
    %131 = vmatprep.subr.mxu0 0.0
    %132 = vmatpush2.msra.mxu0 0.0
    %133 = vmatprep.subr.mxu0 0.0
    %134 = vmatpush2.msra.mxu0 0.0
    %135 = vmatprep.subr.mxu0 0.0
    %136 = vmatpush2.msra.mxu0 0.0
    %137 = vmatprep.subr.mxu0 0.0
    %138 = vmatpush2.msra.mxu0 0.0
    %139 = vmatprep.subr.mxu0 0.0
    %140 = vmatpush2.msra.mxu0 0.0
    %141 = vmatprep.subr.mxu0 0.0
    %142 = vmatpush2.msra.mxu0 0.0
    %143 = vmatprep.subr.mxu0 0.0
    %144 = vmatpush2.msra.mxu0 0.0
    %145 = vmatprep.subr.mxu0 0.0
    %146 = vmatpush2.msra.mxu0 0.0
    %147 = vmatprep.subr.mxu0 0.0
    %148 = vmatpush2.msra.mxu0 0.0
    %149 = vmatprep.subr.mxu0 0.0
    %150 = vmatpush2.msra.mxu0 0.0
    %151 = vmatprep.subr.mxu0 0.0
    %152 = vmatpush2.msra.mxu0 0.0
    %153 = vmatprep.subr.mxu0 0.0
    %154 = vmatpush2.msra.mxu0 0.0
    %155 = vmatprep.subr.mxu0 0.0
    %156 = vmatpush2.msra.mxu0 0.0
    %157 = vmatprep.subr.mxu0 0.0
    %158 = vmatpush2.msra.mxu0 0.0
    %159 = vmatprep.subr.mxu0 0.0
    %160 = vmatpush2.msra.mxu0 0.0
    %161 = vmatprep.subr.mxu0 0.0
    %162 = vmatpush2.msra.mxu0 0.0
    %163 = vmatprep.mubr.f32.mxu0 0.0
    %164 = vmatmul.mubr.f32.gmra.mxu0 %v76
    %v165 = vpop.f32.mrf.mxu0
    %v166 = vadd.f32 %v72, %v165
    %v167 = vpop.f32.mrf.mxu0
    %168 = vmatprep.mubr.f32.mxu0 0.0
    %169 = vmatmul.mubr.f32.gmra.mxu0 %v79
    %v170 = vpop.f32.mrf.mxu0
    %v171 = vadd.f32 %v72, %v170
    %v172 = vpop.f32.mrf.mxu0
    %173 = vmatprep.mubr.f32.mxu0 0.0
    %174 = vmatmul.mubr.f32.gmra.mxu0 %v82
    %v175 = vpop.f32.mrf.mxu0
    %v176 = vadd.f32 %v72, %v175
    %v177 = vpop.f32.mrf.mxu0
    %178 = vmatprep.mubr.f32.mxu0 0.0
    %179 = vmatmul.mubr.f32.gmra.mxu0 %v85
    %v180 = vpop.f32.mrf.mxu0
    %v181 = vadd.f32 %v72, %v180
    %v182 = vpop.f32.mrf.mxu0
    %183 = vmatprep.mubr.f32.mxu0 0.0
    %184 = vmatmul.mubr.f32.gmra.mxu0 %v88
    %v185 = vpop.f32.mrf.mxu0
    %v186 = vadd.f32 %v72, %v185
    %v187 = vpop.f32.mrf.mxu0
    %188 = vmatprep.mubr.f32.mxu0 0.0
    %189 = vmatmul.mubr.f32.gmra.mxu0 %v91
    %v190 = vpop.f32.mrf.mxu0
    %v191 = vadd.f32 %v72, %v190
    %v192 = vpop.f32.mrf.mxu0
    %193 = vmatprep.mubr.f32.mxu0 0.0
    %194 = vmatmul.mubr.f32.gmra.mxu0 %v94
    %v195 = vpop.f32.mrf.mxu0
    %v196 = vadd.f32 %v72, %v195
    %v197 = vpop.f32.mrf.mxu0
    %198 = vmatprep.mubr.f32.mxu0 0.0
    %199 = vmatmul.mubr.f32.gmra.mxu0 %v97
    %v200 = vpop.f32.mrf.mxu0
    %v201 = vadd.f32 %v72, %v200
    %v202 = vpop.f32.mrf.mxu0
    %203 = vdwg.mxu0
    %204 = vst.msk [vmem:[#allocation2] sm:$0xff] %vm74, %v166
    %205 = vst.msk [vmem:[#allocation2 + $0x8] sm:$0xff] %vm74, %v171
    %206 = vst.msk [vmem:[#allocation2 + $0x10] sm:$0xff] %vm74, %v176
    %207 = vst.msk [vmem:[#allocation2 + $0x18] sm:$0xff] %vm74, %v181
    %208 = vst.msk [vmem:[#allocation2 + $0x20] sm:$0xff] %vm74, %v186
    %209 = vst.msk [vmem:[#allocation2 + $0x28] sm:$0xff] %vm74, %v191
    %210 = vst.msk [vmem:[#allocation2 + $0x30] sm:$0xff] %vm74, %v196
    %211 = vst.msk [vmem:[#allocation2 + $0x38] sm:$0xff] %vm74, %v201
    %s212 = scalar_lea.vmem %s1, 32
    %v213 = vld [vmem:[%s212] sm:$0xff]
    %v214 = vld [vmem:[%s212 + $0x8] sm:$0xff]
    %v215 = vld [vmem:[%s212 + $0x10] sm:$0xff]
    %v216 = vld [vmem:[%s212 + $0x18] sm:$0xff]
    %s217 = scalar_lea.vmem %s3, 1
    %v218 = vld [vmem:[%s217] sm:$0x1]
    %v220 = vlaneseq
    %v221 = vshrl.u32 %v220, 7
    %v222 = vsub.s32 0, %v221
    %v223 = vrot.slane %v218, %v222
    %225 = vmatprep.subr.mxu0 0.0
    %226 = vmatpush1.msra.mxu0 0.0
    %227 = vmatprep.subr.mxu0 0.0
    %228 = vmatpush1.msra.mxu0 0.0
    %229 = vmatprep.subr.mxu0 0.0
    %230 = vmatpush1.msra.mxu0 0.0
    %231 = vmatprep.subr.mxu0 0.0
    %232 = vmatpush1.msra.mxu0 0.0
    %233 = vmatprep.subr.mxu0 0.0
    %234 = vmatpush1.msra.mxu0 0.0
    %235 = vmatprep.subr.mxu0 0.0
    %236 = vmatpush1.msra.mxu0 0.0
    %237 = vmatprep.subr.mxu0 0.0
    %238 = vmatpush1.msra.mxu0 0.0
    %239 = vmatprep.subr.mxu0 0.0
    %240 = vmatpush1.msra.mxu0 0.0
    %241 = vmatprep.subr.mxu0 0.0
    %242 = vmatpush1.msra.mxu0 0.0
    %243 = vmatprep.subr.mxu0 0.0
    %244 = vmatpush1.msra.mxu0 0.0
    %245 = vmatprep.subr.mxu0 0.0
    %246 = vmatpush1.msra.mxu0 0.0
    %247 = vmatprep.subr.mxu0 0.0
    %248 = vmatpush1.msra.mxu0 0.0
    %249 = vmatprep.subr.mxu0 0.0
    %250 = vmatpush1.msra.mxu0 %v216
    %251 = vmatprep.subr.mxu0 0.0
    %252 = vmatpush1.msra.mxu0 %v215
    %253 = vmatprep.subr.mxu0 0.0
    %254 = vmatpush1.msra.mxu0 %v214
    %255 = vmatprep.subr.mxu0 0.0
    %256 = vmatpush1.msra.mxu0 %v213
    %257 = vmatprep.subr.mxu0 0.0
    %258 = vmatpush2.msra.mxu0 0.0
    %259 = vmatprep.subr.mxu0 0.0
    %260 = vmatpush2.msra.mxu0 0.0
    %261 = vmatprep.subr.mxu0 0.0
    %262 = vmatpush2.msra.mxu0 0.0
    %263 = vmatprep.subr.mxu0 0.0
    %264 = vmatpush2.msra.mxu0 0.0
    %265 = vmatprep.subr.mxu0 0.0
    %266 = vmatpush2.msra.mxu0 0.0
    %267 = vmatprep.subr.mxu0 0.0
    %268 = vmatpush2.msra.mxu0 0.0
    %269 = vmatprep.subr.mxu0 0.0
    %270 = vmatpush2.msra.mxu0 0.0
    %271 = vmatprep.subr.mxu0 0.0
    %272 = vmatpush2.msra.mxu0 0.0
    %273 = vmatprep.subr.mxu0 0.0
    %274 = vmatpush2.msra.mxu0 0.0
    %275 = vmatprep.subr.mxu0 0.0
    %276 = vmatpush2.msra.mxu0 0.0
    %277 = vmatprep.subr.mxu0 0.0
    %278 = vmatpush2.msra.mxu0 0.0
    %279 = vmatprep.subr.mxu0 0.0
    %280 = vmatpush2.msra.mxu0 0.0
    %281 = vmatprep.subr.mxu0 0.0
    %282 = vmatpush2.msra.mxu0 0.0
    %283 = vmatprep.subr.mxu0 0.0
    %284 = vmatpush2.msra.mxu0 0.0
    %285 = vmatprep.subr.mxu0 0.0
    %286 = vmatpush2.msra.mxu0 0.0
    %287 = vmatprep.subr.mxu0 0.0
    %288 = vmatpush2.msra.mxu0 0.0
    %289 = vmatprep.mubr.f32.mxu0 0.0
    %290 = vmatmul.mubr.f32.gmra.mxu0 %v76
    %v291 = vpop.f32.mrf.mxu0
    %v292 = vadd.f32 %v223, %v291
    %v293 = vpop.f32.mrf.mxu0
    %294 = vmatprep.mubr.f32.mxu0 0.0
    %295 = vmatmul.mubr.f32.gmra.mxu0 %v79
    %v296 = vpop.f32.mrf.mxu0
    %v297 = vadd.f32 %v223, %v296
    %v298 = vpop.f32.mrf.mxu0
    %299 = vmatprep.mubr.f32.mxu0 0.0
    %300 = vmatmul.mubr.f32.gmra.mxu0 %v82
    %v301 = vpop.f32.mrf.mxu0
    %v302 = vadd.f32 %v223, %v301
    %v303 = vpop.f32.mrf.mxu0
    %304 = vmatprep.mubr.f32.mxu0 0.0
    %305 = vmatmul.mubr.f32.gmra.mxu0 %v85
    %v306 = vpop.f32.mrf.mxu0
    %v307 = vadd.f32 %v223, %v306
    %v308 = vpop.f32.mrf.mxu0
    %309 = vmatprep.mubr.f32.mxu0 0.0
    %310 = vmatmul.mubr.f32.gmra.mxu0 %v88
    %v311 = vpop.f32.mrf.mxu0
    %v312 = vadd.f32 %v223, %v311
    %v313 = vpop.f32.mrf.mxu0
    %314 = vmatprep.mubr.f32.mxu0 0.0
    %315 = vmatmul.mubr.f32.gmra.mxu0 %v91
    %v316 = vpop.f32.mrf.mxu0
    %v317 = vadd.f32 %v223, %v316
    %v318 = vpop.f32.mrf.mxu0
    %319 = vmatprep.mubr.f32.mxu0 0.0
    %320 = vmatmul.mubr.f32.gmra.mxu0 %v94
    %v321 = vpop.f32.mrf.mxu0
    %v322 = vadd.f32 %v223, %v321
    %v323 = vpop.f32.mrf.mxu0
    %324 = vmatprep.mubr.f32.mxu0 0.0
    %325 = vmatmul.mubr.f32.gmra.mxu0 %v97
    %v326 = vpop.f32.mrf.mxu0
    %v327 = vadd.f32 %v223, %v326
    %v328 = vpop.f32.mrf.mxu0
    %329 = vdwg.mxu0
    %330 = vst.msk [vmem:[#allocation3] sm:$0xff] %vm74, %v292
    %331 = vst.msk [vmem:[#allocation3 + $0x8] sm:$0xff] %vm74, %v297
    %332 = vst.msk [vmem:[#allocation3 + $0x10] sm:$0xff] %vm74, %v302
    %333 = vst.msk [vmem:[#allocation3 + $0x18] sm:$0xff] %vm74, %v307
    %334 = vst.msk [vmem:[#allocation3 + $0x20] sm:$0xff] %vm74, %v312
    %335 = vst.msk [vmem:[#allocation3 + $0x28] sm:$0xff] %vm74, %v317
    %336 = vst.msk [vmem:[#allocation3 + $0x30] sm:$0xff] %vm74, %v322
    %337 = vst.msk [vmem:[#allocation3 + $0x38] sm:$0xff] %vm74, %v327
    %s338 = scalar_lea.vmem %s1, 64
    %v339 = vld [vmem:[%s338] sm:$0xff]
    %v340 = vld [vmem:[%s338 + $0x8] sm:$0xff]
    %v341 = vld [vmem:[%s338 + $0x10] sm:$0xff]
    %v342 = vld [vmem:[%s338 + $0x18] sm:$0xff]
    %s343 = scalar_lea.vmem %s3, 2
    %v344 = vld [vmem:[%s343] sm:$0x1]
    %v346 = vlaneseq
    %v347 = vshrl.u32 %v346, 7
    %v348 = vsub.s32 0, %v347
    %v349 = vrot.slane %v344, %v348
    %351 = vmatprep.subr.mxu0 0.0
    %352 = vmatpush1.msra.mxu0 0.0
    %353 = vmatprep.subr.mxu0 0.0
    %354 = vmatpush1.msra.mxu0 0.0
    %355 = vmatprep.subr.mxu0 0.0
    %356 = vmatpush1.msra.mxu0 0.0
    %357 = vmatprep.subr.mxu0 0.0
    %358 = vmatpush1.msra.mxu0 0.0
    %359 = vmatprep.subr.mxu0 0.0
    %360 = vmatpush1.msra.mxu0 0.0
    %361 = vmatprep.subr.mxu0 0.0
    %362 = vmatpush1.msra.mxu0 0.0
    %363 = vmatprep.subr.mxu0 0.0
    %364 = vmatpush1.msra.mxu0 0.0
    %365 = vmatprep.subr.mxu0 0.0
    %366 = vmatpush1.msra.mxu0 0.0
    %367 = vmatprep.subr.mxu0 0.0
    %368 = vmatpush1.msra.mxu0 0.0
    %369 = vmatprep.subr.mxu0 0.0
    %370 = vmatpush1.msra.mxu0 0.0
    %371 = vmatprep.subr.mxu0 0.0
    %372 = vmatpush1.msra.mxu0 0.0
    %373 = vmatprep.subr.mxu0 0.0
    %374 = vmatpush1.msra.mxu0 0.0
    %375 = vmatprep.subr.mxu0 0.0
    %376 = vmatpush1.msra.mxu0 %v342
    %377 = vmatprep.subr.mxu0 0.0
    %378 = vmatpush1.msra.mxu0 %v341
    %379 = vmatprep.subr.mxu0 0.0
    %380 = vmatpush1.msra.mxu0 %v340
    %381 = vmatprep.subr.mxu0 0.0
    %382 = vmatpush1.msra.mxu0 %v339
    %383 = vmatprep.subr.mxu0 0.0
    %384 = vmatpush2.msra.mxu0 0.0
    %385 = vmatprep.subr.mxu0 0.0
    %386 = vmatpush2.msra.mxu0 0.0
    %387 = vmatprep.subr.mxu0 0.0
    %388 = vmatpush2.msra.mxu0 0.0
    %389 = vmatprep.subr.mxu0 0.0
    %390 = vmatpush2.msra.mxu0 0.0
    %391 = vmatprep.subr.mxu0 0.0
    %392 = vmatpush2.msra.mxu0 0.0
    %393 = vmatprep.subr.mxu0 0.0
    %394 = vmatpush2.msra.mxu0 0.0
    %395 = vmatprep.subr.mxu0 0.0
    %396 = vmatpush2.msra.mxu0 0.0
    %397 = vmatprep.subr.mxu0 0.0
    %398 = vmatpush2.msra.mxu0 0.0
    %399 = vmatprep.subr.mxu0 0.0
    %400 = vmatpush2.msra.mxu0 0.0
    %401 = vmatprep.subr.mxu0 0.0
    %402 = vmatpush2.msra.mxu0 0.0
    %403 = vmatprep.subr.mxu0 0.0
    %404 = vmatpush2.msra.mxu0 0.0
    %405 = vmatprep.subr.mxu0 0.0
    %406 = vmatpush2.msra.mxu0 0.0
    %407 = vmatprep.subr.mxu0 0.0
    %408 = vmatpush2.msra.mxu0 0.0
    %409 = vmatprep.subr.mxu0 0.0
    %410 = vmatpush2.msra.mxu0 0.0
    %411 = vmatprep.subr.mxu0 0.0
    %412 = vmatpush2.msra.mxu0 0.0
    %413 = vmatprep.subr.mxu0 0.0
    %414 = vmatpush2.msra.mxu0 0.0
    %415 = vmatprep.mubr.f32.mxu0 0.0
    %416 = vmatmul.mubr.f32.gmra.mxu0 %v76
    %v417 = vpop.f32.mrf.mxu0
    %v418 = vadd.f32 %v349, %v417
    %v419 = vpop.f32.mrf.mxu0
    %420 = vmatprep.mubr.f32.mxu0 0.0
    %421 = vmatmul.mubr.f32.gmra.mxu0 %v79
    %v422 = vpop.f32.mrf.mxu0
    %v423 = vadd.f32 %v349, %v422
    %v424 = vpop.f32.mrf.mxu0
    %425 = vmatprep.mubr.f32.mxu0 0.0
    %426 = vmatmul.mubr.f32.gmra.mxu0 %v82
    %v427 = vpop.f32.mrf.mxu0
    %v428 = vadd.f32 %v349, %v427
    %v429 = vpop.f32.mrf.mxu0
    %430 = vmatprep.mubr.f32.mxu0 0.0
    %431 = vmatmul.mubr.f32.gmra.mxu0 %v85
    %v432 = vpop.f32.mrf.mxu0
    %v433 = vadd.f32 %v349, %v432
    %v434 = vpop.f32.mrf.mxu0
    %435 = vmatprep.mubr.f32.mxu0 0.0
    %436 = vmatmul.mubr.f32.gmra.mxu0 %v88
    %v437 = vpop.f32.mrf.mxu0
    %v438 = vadd.f32 %v349, %v437
    %v439 = vpop.f32.mrf.mxu0
    %440 = vmatprep.mubr.f32.mxu0 0.0
    %441 = vmatmul.mubr.f32.gmra.mxu0 %v91
    %v442 = vpop.f32.mrf.mxu0
    %v443 = vadd.f32 %v349, %v442
    %v444 = vpop.f32.mrf.mxu0
    %445 = vmatprep.mubr.f32.mxu0 0.0
    %446 = vmatmul.mubr.f32.gmra.mxu0 %v94
    %v447 = vpop.f32.mrf.mxu0
    %v448 = vadd.f32 %v349, %v447
    %v449 = vpop.f32.mrf.mxu0
    %450 = vmatprep.mubr.f32.mxu0 0.0
    %451 = vmatmul.mubr.f32.gmra.mxu0 %v97
    %v452 = vpop.f32.mrf.mxu0
    %v453 = vadd.f32 %v349, %v452
    %v454 = vpop.f32.mrf.mxu0
    %455 = vdwg.mxu0
    %456 = vst.msk [vmem:[#allocation4] sm:$0xff] %vm74, %v418
    %457 = vst.msk [vmem:[#allocation4 + $0x8] sm:$0xff] %vm74, %v423
    %458 = vst.msk [vmem:[#allocation4 + $0x10] sm:$0xff] %vm74, %v428
    %459 = vst.msk [vmem:[#allocation4 + $0x18] sm:$0xff] %vm74, %v433
    %460 = vst.msk [vmem:[#allocation4 + $0x20] sm:$0xff] %vm74, %v438
    %461 = vst.msk [vmem:[#allocation4 + $0x28] sm:$0xff] %vm74, %v443
    %462 = vst.msk [vmem:[#allocation4 + $0x30] sm:$0xff] %vm74, %v448
    %463 = vst.msk [vmem:[#allocation4 + $0x38] sm:$0xff] %vm74, %v453
    %v464 = vld [vmem:[#allocation5] sm:$0xff]
    %v466 = vsel %vm74, %v464, 0
    %468 = vmatprep.subr.mxu0 0.0
    %469 = vmatpush1.msra.mxu0 0.0
    %470 = vmatprep.subr.mxu0 0.0
    %471 = vmatpush1.msra.mxu0 0.0
    %472 = vmatprep.subr.mxu0 0.0
    %473 = vmatpush1.msra.mxu0 0.0
    %474 = vmatprep.subr.mxu0 0.0
    %475 = vmatpush1.msra.mxu0 0.0
    %476 = vmatprep.subr.mxu0 0.0
    %477 = vmatpush1.msra.mxu0 0.0
    %478 = vmatprep.subr.mxu0 0.0
    %479 = vmatpush1.msra.mxu0 0.0
    %480 = vmatprep.subr.mxu0 0.0
    %481 = vmatpush1.msra.mxu0 0.0
    %482 = vmatprep.subr.mxu0 0.0
    %483 = vmatpush1.msra.mxu0 0.0
    %484 = vmatprep.subr.mxu0 0.0
    %485 = vmatpush1.msra.mxu0 0.0
    %486 = vmatprep.subr.mxu0 0.0
    %487 = vmatpush1.msra.mxu0 0.0
    %488 = vmatprep.subr.mxu0 0.0
    %489 = vmatpush1.msra.mxu0 0.0
    %490 = vmatprep.subr.mxu0 0.0
    %491 = vmatpush1.msra.mxu0 0.0
    %492 = vmatprep.subr.mxu0 0.0
    %493 = vmatpush1.msra.mxu0 %v43
    %494 = vmatprep.subr.mxu0 0.0
    %495 = vmatpush1.msra.mxu0 %v42
    %496 = vmatprep.subr.mxu0 0.0
    %497 = vmatpush1.msra.mxu0 %v41
    %498 = vmatprep.subr.mxu0 0.0
    %499 = vmatpush1.msra.mxu0 %v40
    %500 = vmatprep.subr.mxu0 0.0
    %501 = vmatpush2.msra.mxu0 0.0
    %502 = vmatprep.subr.mxu0 0.0
    %503 = vmatpush2.msra.mxu0 0.0
    %504 = vmatprep.subr.mxu0 0.0
    %505 = vmatpush2.msra.mxu0 0.0
    %506 = vmatprep.subr.mxu0 0.0
    %507 = vmatpush2.msra.mxu0 0.0
    %508 = vmatprep.subr.mxu0 0.0
    %509 = vmatpush2.msra.mxu0 0.0
    %510 = vmatprep.subr.mxu0 0.0
    %511 = vmatpush2.msra.mxu0 0.0
    %512 = vmatprep.subr.mxu0 0.0
    %513 = vmatpush2.msra.mxu0 0.0
    %514 = vmatprep.subr.mxu0 0.0
    %515 = vmatpush2.msra.mxu0 0.0
    %516 = vmatprep.subr.mxu0 0.0
    %517 = vmatpush2.msra.mxu0 0.0
    %518 = vmatprep.subr.mxu0 0.0
    %519 = vmatpush2.msra.mxu0 0.0
    %520 = vmatprep.subr.mxu0 0.0
    %521 = vmatpush2.msra.mxu0 0.0
    %522 = vmatprep.subr.mxu0 0.0
    %523 = vmatpush2.msra.mxu0 0.0
    %524 = vmatprep.subr.mxu0 0.0
    %525 = vmatpush2.msra.mxu0 0.0
    %526 = vmatprep.subr.mxu0 0.0
    %527 = vmatpush2.msra.mxu0 0.0
    %528 = vmatprep.subr.mxu0 0.0
    %529 = vmatpush2.msra.mxu0 0.0
    %530 = vmatprep.subr.mxu0 0.0
    %531 = vmatpush2.msra.mxu0 0.0
    %532 = vmatprep.mubr.f32.mxu0 0.0
    %533 = vmatmul.mubr.f32.gmra.mxu0 %v466
    %v534 = vpop.f32.mrf.mxu0
    %v535 = vadd.f32 0.0, %v534
    %v536 = vpop.f32.mrf.mxu0
    %537 = vdwg.mxu0
    %538 = vmatprep.subr.mxu0 0.0
    %539 = vmatpush1.msra.mxu0 0.0
    %540 = vmatprep.subr.mxu0 0.0
    %541 = vmatpush1.msra.mxu0 0.0
    %542 = vmatprep.subr.mxu0 0.0
    %543 = vmatpush1.msra.mxu0 0.0
    %544 = vmatprep.subr.mxu0 0.0
    %545 = vmatpush1.msra.mxu0 0.0
    %546 = vmatprep.subr.mxu0 0.0
    %547 = vmatpush1.msra.mxu0 0.0
    %548 = vmatprep.subr.mxu0 0.0
    %549 = vmatpush1.msra.mxu0 0.0
    %550 = vmatprep.subr.mxu0 0.0
    %551 = vmatpush1.msra.mxu0 0.0
    %552 = vmatprep.subr.mxu0 0.0
    %553 = vmatpush1.msra.mxu0 0.0
    %554 = vmatprep.subr.mxu0 0.0
    %555 = vmatpush1.msra.mxu0 0.0
    %556 = vmatprep.subr.mxu0 0.0
    %557 = vmatpush1.msra.mxu0 0.0
    %558 = vmatprep.subr.mxu0 0.0
    %559 = vmatpush1.msra.mxu0 0.0
    %560 = vmatprep.subr.mxu0 0.0
    %561 = vmatpush1.msra.mxu0 0.0
    %562 = vmatprep.subr.mxu0 0.0
    %563 = vmatpush1.msra.mxu0 %v48
    %564 = vmatprep.subr.mxu0 0.0
    %565 = vmatpush1.msra.mxu0 %v47
    %566 = vmatprep.subr.mxu0 0.0
    %567 = vmatpush1.msra.mxu0 %v46
    %568 = vmatprep.subr.mxu0 0.0
    %569 = vmatpush1.msra.mxu0 %v45
    %570 = vmatprep.subr.mxu0 0.0
    %571 = vmatpush2.msra.mxu0 0.0
    %572 = vmatprep.subr.mxu0 0.0
    %573 = vmatpush2.msra.mxu0 0.0
    %574 = vmatprep.subr.mxu0 0.0
    %575 = vmatpush2.msra.mxu0 0.0
    %576 = vmatprep.subr.mxu0 0.0
    %577 = vmatpush2.msra.mxu0 0.0
    %578 = vmatprep.subr.mxu0 0.0
    %579 = vmatpush2.msra.mxu0 0.0
    %580 = vmatprep.subr.mxu0 0.0
    %581 = vmatpush2.msra.mxu0 0.0
    %582 = vmatprep.subr.mxu0 0.0
    %583 = vmatpush2.msra.mxu0 0.0
    %584 = vmatprep.subr.mxu0 0.0
    %585 = vmatpush2.msra.mxu0 0.0
    %586 = vmatprep.subr.mxu0 0.0
    %587 = vmatpush2.msra.mxu0 0.0
    %588 = vmatprep.subr.mxu0 0.0
    %589 = vmatpush2.msra.mxu0 0.0
    %590 = vmatprep.subr.mxu0 0.0
    %591 = vmatpush2.msra.mxu0 0.0
    %592 = vmatprep.subr.mxu0 0.0
    %593 = vmatpush2.msra.mxu0 0.0
    %594 = vmatprep.subr.mxu0 0.0
    %595 = vmatpush2.msra.mxu0 0.0
    %596 = vmatprep.subr.mxu0 0.0
    %597 = vmatpush2.msra.mxu0 0.0
    %598 = vmatprep.subr.mxu0 0.0
    %599 = vmatpush2.msra.mxu0 0.0
    %600 = vmatprep.subr.mxu0 0.0
    %601 = vmatpush2.msra.mxu0 0.0
    %602 = vmatprep.mubr.f32.mxu0 0.0
    %603 = vmatmul.mubr.f32.gmra.mxu0 %v466
    %v604 = vpop.f32.mrf.mxu0
    %v605 = vadd.f32 0.0, %v604
    %v606 = vpop.f32.mrf.mxu0
    %607 = vdwg.mxu0
    %v608 = vld [vmem:[#allocation2] sm:$0xff]
    %v609 = vadd.f32 %v608, %v535
    %v610 = vxor.u32 %v609, 2147483648
    %v611 = vmul.f32 %v610, 1.442695
    %v612 = vpow.pop %v611
    %v613 = vadd.f32 %v612, 1.0
    %v614 = vrcp.pop %v613
    %v615 = vmul.f32 1.0, %v614
    %v616 = vld [vmem:[#allocation3] sm:$0xff]
    %v617 = vadd.f32 %v616, %v605
    %v618 = vxor.u32 %v617, 2147483648
    %v619 = vmul.f32 %v618, 1.442695
    %v620 = vpow.pop %v619
    %v621 = vadd.f32 %v620, 1.0
    %v622 = vrcp.pop %v621
    %v623 = vmul.f32 1.0, %v622
    %v624 = vld [vmem:[#allocation4] sm:$0xff]
    %v626 = vlaneseq
    %v627 = vshrl.u32 %v626, 7
    %v628 = vsub.s32 0, %v627
    %v629 = vrot.slane %v54, %v628
    %631 = vmatprep.subr.mxu0 0.0
    %632 = vmatpush1.msra.mxu0 0.0
    %633 = vmatprep.subr.mxu0 0.0
    %634 = vmatpush1.msra.mxu0 0.0
    %635 = vmatprep.subr.mxu0 0.0
    %636 = vmatpush1.msra.mxu0 0.0
    %637 = vmatprep.subr.mxu0 0.0
    %638 = vmatpush1.msra.mxu0 0.0
    %639 = vmatprep.subr.mxu0 0.0
    %640 = vmatpush1.msra.mxu0 0.0
    %641 = vmatprep.subr.mxu0 0.0
    %642 = vmatpush1.msra.mxu0 0.0
    %643 = vmatprep.subr.mxu0 0.0
    %644 = vmatpush1.msra.mxu0 0.0
    %645 = vmatprep.subr.mxu0 0.0
    %646 = vmatpush1.msra.mxu0 0.0
    %647 = vmatprep.subr.mxu0 0.0
    %648 = vmatpush1.msra.mxu0 0.0
    %649 = vmatprep.subr.mxu0 0.0
    %650 = vmatpush1.msra.mxu0 0.0
    %651 = vmatprep.subr.mxu0 0.0
    %652 = vmatpush1.msra.mxu0 0.0
    %653 = vmatprep.subr.mxu0 0.0
    %654 = vmatpush1.msra.mxu0 0.0
    %655 = vmatprep.subr.mxu0 0.0
    %656 = vmatpush1.msra.mxu0 %v53
    %657 = vmatprep.subr.mxu0 0.0
    %658 = vmatpush1.msra.mxu0 %v52
    %659 = vmatprep.subr.mxu0 0.0
    %660 = vmatpush1.msra.mxu0 %v51
    %661 = vmatprep.subr.mxu0 0.0
    %662 = vmatpush1.msra.mxu0 %v50
    %663 = vmatprep.subr.mxu0 0.0
    %664 = vmatpush2.msra.mxu0 0.0
    %665 = vmatprep.subr.mxu0 0.0
    %666 = vmatpush2.msra.mxu0 0.0
    %667 = vmatprep.subr.mxu0 0.0
    %668 = vmatpush2.msra.mxu0 0.0
    %669 = vmatprep.subr.mxu0 0.0
    %670 = vmatpush2.msra.mxu0 0.0
    %671 = vmatprep.subr.mxu0 0.0
    %672 = vmatpush2.msra.mxu0 0.0
    %673 = vmatprep.subr.mxu0 0.0
    %674 = vmatpush2.msra.mxu0 0.0
    %675 = vmatprep.subr.mxu0 0.0
    %676 = vmatpush2.msra.mxu0 0.0
    %677 = vmatprep.subr.mxu0 0.0
    %678 = vmatpush2.msra.mxu0 0.0
    %679 = vmatprep.subr.mxu0 0.0
    %680 = vmatpush2.msra.mxu0 0.0
    %681 = vmatprep.subr.mxu0 0.0
    %682 = vmatpush2.msra.mxu0 0.0
    %683 = vmatprep.subr.mxu0 0.0
    %684 = vmatpush2.msra.mxu0 0.0
    %685 = vmatprep.subr.mxu0 0.0
    %686 = vmatpush2.msra.mxu0 0.0
    %687 = vmatprep.subr.mxu0 0.0
    %688 = vmatpush2.msra.mxu0 0.0
    %689 = vmatprep.subr.mxu0 0.0
    %690 = vmatpush2.msra.mxu0 0.0
    %691 = vmatprep.subr.mxu0 0.0
    %692 = vmatpush2.msra.mxu0 0.0
    %693 = vmatprep.subr.mxu0 0.0
    %694 = vmatpush2.msra.mxu0 0.0
    %695 = vmatprep.mubr.f32.mxu0 0.0
    %696 = vmatmul.mubr.f32.gmra.mxu0 %v466
    %v697 = vpop.f32.mrf.mxu0
    %v698 = vadd.f32 %v629, %v697
    %v699 = vpop.f32.mrf.mxu0
    %700 = vdwg.mxu0
    %v701 = vmul.f32 %v615, %v698
    %v702 = vadd.f32 %v624, %v701
    %v703 = vtanh.pop %v702
    %v704 = vsub.f32 1.0, %v623
    %v705 = vmul.f32 %v704, %v703
    %v706 = vmul.f32 %v623, %v464
    %v707 = vadd.f32 %v705, %v706
    %708 = vst.msk [vmem:[%s5] sm:$0xff] %vm74, %v707
    %v710 = vsel %vm74, %v707, 0
    %712 = vmatprep.subr.mxu0 0.0
    %713 = vmatpush1.msra.mxu0 0.0
    %714 = vmatprep.subr.mxu0 0.0
    %715 = vmatpush1.msra.mxu0 0.0
    %716 = vmatprep.subr.mxu0 0.0
    %717 = vmatpush1.msra.mxu0 0.0
    %718 = vmatprep.subr.mxu0 0.0
    %719 = vmatpush1.msra.mxu0 0.0
    %720 = vmatprep.subr.mxu0 0.0
    %721 = vmatpush1.msra.mxu0 0.0
    %722 = vmatprep.subr.mxu0 0.0
    %723 = vmatpush1.msra.mxu0 0.0
    %724 = vmatprep.subr.mxu0 0.0
    %725 = vmatpush1.msra.mxu0 0.0
    %726 = vmatprep.subr.mxu0 0.0
    %727 = vmatpush1.msra.mxu0 0.0
    %728 = vmatprep.subr.mxu0 0.0
    %729 = vmatpush1.msra.mxu0 0.0
    %730 = vmatprep.subr.mxu0 0.0
    %731 = vmatpush1.msra.mxu0 0.0
    %732 = vmatprep.subr.mxu0 0.0
    %733 = vmatpush1.msra.mxu0 0.0
    %734 = vmatprep.subr.mxu0 0.0
    %735 = vmatpush1.msra.mxu0 0.0
    %736 = vmatprep.subr.mxu0 0.0
    %737 = vmatpush1.msra.mxu0 %v43
    %738 = vmatprep.subr.mxu0 0.0
    %739 = vmatpush1.msra.mxu0 %v42
    %740 = vmatprep.subr.mxu0 0.0
    %741 = vmatpush1.msra.mxu0 %v41
    %742 = vmatprep.subr.mxu0 0.0
    %743 = vmatpush1.msra.mxu0 %v40
    %744 = vmatprep.subr.mxu0 0.0
    %745 = vmatpush2.msra.mxu0 0.0
    %746 = vmatprep.subr.mxu0 0.0
    %747 = vmatpush2.msra.mxu0 0.0
    %748 = vmatprep.subr.mxu0 0.0
    %749 = vmatpush2.msra.mxu0 0.0
    %750 = vmatprep.subr.mxu0 0.0
    %751 = vmatpush2.msra.mxu0 0.0
    %752 = vmatprep.subr.mxu0 0.0
    %753 = vmatpush2.msra.mxu0 0.0
    %754 = vmatprep.subr.mxu0 0.0
    %755 = vmatpush2.msra.mxu0 0.0
    %756 = vmatprep.subr.mxu0 0.0
    %757 = vmatpush2.msra.mxu0 0.0
    %758 = vmatprep.subr.mxu0 0.0
    %759 = vmatpush2.msra.mxu0 0.0
    %760 = vmatprep.subr.mxu0 0.0
    %761 = vmatpush2.msra.mxu0 0.0
    %762 = vmatprep.subr.mxu0 0.0
    %763 = vmatpush2.msra.mxu0 0.0
    %764 = vmatprep.subr.mxu0 0.0
    %765 = vmatpush2.msra.mxu0 0.0
    %766 = vmatprep.subr.mxu0 0.0
    %767 = vmatpush2.msra.mxu0 0.0
    %768 = vmatprep.subr.mxu0 0.0
    %769 = vmatpush2.msra.mxu0 0.0
    %770 = vmatprep.subr.mxu0 0.0
    %771 = vmatpush2.msra.mxu0 0.0
    %772 = vmatprep.subr.mxu0 0.0
    %773 = vmatpush2.msra.mxu0 0.0
    %774 = vmatprep.subr.mxu0 0.0
    %775 = vmatpush2.msra.mxu0 0.0
    %776 = vmatprep.mubr.f32.mxu0 0.0
    %777 = vmatmul.mubr.f32.gmra.mxu0 %v710
    %v778 = vpop.f32.mrf.mxu0
    %v779 = vadd.f32 0.0, %v778
    %v780 = vpop.f32.mrf.mxu0
    %781 = vdwg.mxu0
    %782 = vmatprep.subr.mxu0 0.0
    %783 = vmatpush1.msra.mxu0 0.0
    %784 = vmatprep.subr.mxu0 0.0
    %785 = vmatpush1.msra.mxu0 0.0
    %786 = vmatprep.subr.mxu0 0.0
    %787 = vmatpush1.msra.mxu0 0.0
    %788 = vmatprep.subr.mxu0 0.0
    %789 = vmatpush1.msra.mxu0 0.0
    %790 = vmatprep.subr.mxu0 0.0
    %791 = vmatpush1.msra.mxu0 0.0
    %792 = vmatprep.subr.mxu0 0.0
    %793 = vmatpush1.msra.mxu0 0.0
    %794 = vmatprep.subr.mxu0 0.0
    %795 = vmatpush1.msra.mxu0 0.0
    %796 = vmatprep.subr.mxu0 0.0
    %797 = vmatpush1.msra.mxu0 0.0
    %798 = vmatprep.subr.mxu0 0.0
    %799 = vmatpush1.msra.mxu0 0.0
    %800 = vmatprep.subr.mxu0 0.0
    %801 = vmatpush1.msra.mxu0 0.0
    %802 = vmatprep.subr.mxu0 0.0
    %803 = vmatpush1.msra.mxu0 0.0
    %804 = vmatprep.subr.mxu0 0.0
    %805 = vmatpush1.msra.mxu0 0.0
    %806 = vmatprep.subr.mxu0 0.0
    %807 = vmatpush1.msra.mxu0 %v48
    %808 = vmatprep.subr.mxu0 0.0
    %809 = vmatpush1.msra.mxu0 %v47
    %810 = vmatprep.subr.mxu0 0.0
    %811 = vmatpush1.msra.mxu0 %v46
    %812 = vmatprep.subr.mxu0 0.0
    %813 = vmatpush1.msra.mxu0 %v45
    %814 = vmatprep.subr.mxu0 0.0
    %815 = vmatpush2.msra.mxu0 0.0
    %816 = vmatprep.subr.mxu0 0.0
    %817 = vmatpush2.msra.mxu0 0.0
    %818 = vmatprep.subr.mxu0 0.0
    %819 = vmatpush2.msra.mxu0 0.0
    %820 = vmatprep.subr.mxu0 0.0
    %821 = vmatpush2.msra.mxu0 0.0
    %822 = vmatprep.subr.mxu0 0.0
    %823 = vmatpush2.msra.mxu0 0.0
    %824 = vmatprep.subr.mxu0 0.0
    %825 = vmatpush2.msra.mxu0 0.0
    %826 = vmatprep.subr.mxu0 0.0
    %827 = vmatpush2.msra.mxu0 0.0
    %828 = vmatprep.subr.mxu0 0.0
    %829 = vmatpush2.msra.mxu0 0.0
    %830 = vmatprep.subr.mxu0 0.0
    %831 = vmatpush2.msra.mxu0 0.0
    %832 = vmatprep.subr.mxu0 0.0
    %833 = vmatpush2.msra.mxu0 0.0
    %834 = vmatprep.subr.mxu0 0.0
    %835 = vmatpush2.msra.mxu0 0.0
    %836 = vmatprep.subr.mxu0 0.0
    %837 = vmatpush2.msra.mxu0 0.0
    %838 = vmatprep.subr.mxu0 0.0
    %839 = vmatpush2.msra.mxu0 0.0
    %840 = vmatprep.subr.mxu0 0.0
    %841 = vmatpush2.msra.mxu0 0.0
    %842 = vmatprep.subr.mxu0 0.0
    %843 = vmatpush2.msra.mxu0 0.0
    %844 = vmatprep.subr.mxu0 0.0
    %845 = vmatpush2.msra.mxu0 0.0
    %846 = vmatprep.mubr.f32.mxu0 0.0
    %847 = vmatmul.mubr.f32.gmra.mxu0 %v710
    %v848 = vpop.f32.mrf.mxu0
    %v849 = vadd.f32 0.0, %v848
    %v850 = vpop.f32.mrf.mxu0
    %851 = vdwg.mxu0
    %s852 = scalar_lea.vmem [#allocation2], 8
    %v853 = vld [vmem:[%s852] sm:$0xff]
    %v854 = vadd.f32 %v853, %v779
    %v855 = vxor.u32 %v854, 2147483648
    %v856 = vmul.f32 %v855, 1.442695
    %v857 = vpow.pop %v856
    %v858 = vadd.f32 %v857, 1.0
    %v859 = vrcp.pop %v858
    %v860 = vmul.f32 1.0, %v859
    %s861 = scalar_lea.vmem [#allocation3], 8
    %v862 = vld [vmem:[%s861] sm:$0xff]
    %v863 = vadd.f32 %v862, %v849
    %v864 = vxor.u32 %v863, 2147483648
    %v865 = vmul.f32 %v864, 1.442695
    %v866 = vpow.pop %v865
    %v867 = vadd.f32 %v866, 1.0
    %v868 = vrcp.pop %v867
    %v869 = vmul.f32 1.0, %v868
    %s870 = scalar_lea.vmem [#allocation4], 8
    %v871 = vld [vmem:[%s870] sm:$0xff]
    %872 = vmatprep.subr.mxu0 0.0
    %873 = vmatpush1.msra.mxu0 0.0
    %874 = vmatprep.subr.mxu0 0.0
    %875 = vmatpush1.msra.mxu0 0.0
    %876 = vmatprep.subr.mxu0 0.0
    %877 = vmatpush1.msra.mxu0 0.0
    %878 = vmatprep.subr.mxu0 0.0
    %879 = vmatpush1.msra.mxu0 0.0
    %880 = vmatprep.subr.mxu0 0.0
    %881 = vmatpush1.msra.mxu0 0.0
    %882 = vmatprep.subr.mxu0 0.0
    %883 = vmatpush1.msra.mxu0 0.0
    %884 = vmatprep.subr.mxu0 0.0
    %885 = vmatpush1.msra.mxu0 0.0
    %886 = vmatprep.subr.mxu0 0.0
    %887 = vmatpush1.msra.mxu0 0.0
    %888 = vmatprep.subr.mxu0 0.0
    %889 = vmatpush1.msra.mxu0 0.0
    %890 = vmatprep.subr.mxu0 0.0
    %891 = vmatpush1.msra.mxu0 0.0
    %892 = vmatprep.subr.mxu0 0.0
    %893 = vmatpush1.msra.mxu0 0.0
    %894 = vmatprep.subr.mxu0 0.0
    %895 = vmatpush1.msra.mxu0 0.0
    %896 = vmatprep.subr.mxu0 0.0
    %897 = vmatpush1.msra.mxu0 %v53
    %898 = vmatprep.subr.mxu0 0.0
    %899 = vmatpush1.msra.mxu0 %v52
    %900 = vmatprep.subr.mxu0 0.0
    %901 = vmatpush1.msra.mxu0 %v51
    %902 = vmatprep.subr.mxu0 0.0
    %903 = vmatpush1.msra.mxu0 %v50
    %904 = vmatprep.subr.mxu0 0.0
    %905 = vmatpush2.msra.mxu0 0.0
    %906 = vmatprep.subr.mxu0 0.0
    %907 = vmatpush2.msra.mxu0 0.0
    %908 = vmatprep.subr.mxu0 0.0
    %909 = vmatpush2.msra.mxu0 0.0
    %910 = vmatprep.subr.mxu0 0.0
    %911 = vmatpush2.msra.mxu0 0.0
    %912 = vmatprep.subr.mxu0 0.0
    %913 = vmatpush2.msra.mxu0 0.0
    %914 = vmatprep.subr.mxu0 0.0
    %915 = vmatpush2.msra.mxu0 0.0
    %916 = vmatprep.subr.mxu0 0.0
    %917 = vmatpush2.msra.mxu0 0.0
    %918 = vmatprep.subr.mxu0 0.0
    %919 = vmatpush2.msra.mxu0 0.0
    %920 = vmatprep.subr.mxu0 0.0
    %921 = vmatpush2.msra.mxu0 0.0
    %922 = vmatprep.subr.mxu0 0.0
    %923 = vmatpush2.msra.mxu0 0.0
    %924 = vmatprep.subr.mxu0 0.0
    %925 = vmatpush2.msra.mxu0 0.0
    %926 = vmatprep.subr.mxu0 0.0
    %927 = vmatpush2.msra.mxu0 0.0
    %928 = vmatprep.subr.mxu0 0.0
    %929 = vmatpush2.msra.mxu0 0.0
    %930 = vmatprep.subr.mxu0 0.0
    %931 = vmatpush2.msra.mxu0 0.0
    %932 = vmatprep.subr.mxu0 0.0
    %933 = vmatpush2.msra.mxu0 0.0
    %934 = vmatprep.subr.mxu0 0.0
    %935 = vmatpush2.msra.mxu0 0.0
    %936 = vmatprep.mubr.f32.mxu0 0.0
    %937 = vmatmul.mubr.f32.gmra.mxu0 %v710
    %v938 = vpop.f32.mrf.mxu0
    %v939 = vadd.f32 %v629, %v938
    %v940 = vpop.f32.mrf.mxu0
    %941 = vdwg.mxu0
    %v942 = vmul.f32 %v860, %v939
    %v943 = vadd.f32 %v871, %v942
    %v944 = vtanh.pop %v943
    %v945 = vsub.f32 1.0, %v869
    %v946 = vmul.f32 %v945, %v944
    %v947 = vmul.f32 %v869, %v707
    %v948 = vadd.f32 %v946, %v947
    %s949 = scalar_lea.vmem %s5, 8
    %950 = vst.msk [vmem:[%s949] sm:$0xff] %vm74, %v948
    %v952 = vsel %vm74, %v948, 0
    %954 = vmatprep.subr.mxu0 0.0
    %955 = vmatpush1.msra.mxu0 0.0
    %956 = vmatprep.subr.mxu0 0.0
    %957 = vmatpush1.msra.mxu0 0.0
    %958 = vmatprep.subr.mxu0 0.0
    %959 = vmatpush1.msra.mxu0 0.0
    %960 = vmatprep.subr.mxu0 0.0
    %961 = vmatpush1.msra.mxu0 0.0
    %962 = vmatprep.subr.mxu0 0.0
    %963 = vmatpush1.msra.mxu0 0.0
    %964 = vmatprep.subr.mxu0 0.0
    %965 = vmatpush1.msra.mxu0 0.0
    %966 = vmatprep.subr.mxu0 0.0
    %967 = vmatpush1.msra.mxu0 0.0
    %968 = vmatprep.subr.mxu0 0.0
    %969 = vmatpush1.msra.mxu0 0.0
    %970 = vmatprep.subr.mxu0 0.0
    %971 = vmatpush1.msra.mxu0 0.0
    %972 = vmatprep.subr.mxu0 0.0
    %973 = vmatpush1.msra.mxu0 0.0
    %974 = vmatprep.subr.mxu0 0.0
    %975 = vmatpush1.msra.mxu0 0.0
    %976 = vmatprep.subr.mxu0 0.0
    %977 = vmatpush1.msra.mxu0 0.0
    %978 = vmatprep.subr.mxu0 0.0
    %979 = vmatpush1.msra.mxu0 %v43
    %980 = vmatprep.subr.mxu0 0.0
    %981 = vmatpush1.msra.mxu0 %v42
    %982 = vmatprep.subr.mxu0 0.0
    %983 = vmatpush1.msra.mxu0 %v41
    %984 = vmatprep.subr.mxu0 0.0
    %985 = vmatpush1.msra.mxu0 %v40
    %986 = vmatprep.subr.mxu0 0.0
    %987 = vmatpush2.msra.mxu0 0.0
    %988 = vmatprep.subr.mxu0 0.0
    %989 = vmatpush2.msra.mxu0 0.0
    %990 = vmatprep.subr.mxu0 0.0
    %991 = vmatpush2.msra.mxu0 0.0
    %992 = vmatprep.subr.mxu0 0.0
    %993 = vmatpush2.msra.mxu0 0.0
    %994 = vmatprep.subr.mxu0 0.0
    %995 = vmatpush2.msra.mxu0 0.0
    %996 = vmatprep.subr.mxu0 0.0
    %997 = vmatpush2.msra.mxu0 0.0
    %998 = vmatprep.subr.mxu0 0.0
    %999 = vmatpush2.msra.mxu0 0.0
    %1000 = vmatprep.subr.mxu0 0.0
    %1001 = vmatpush2.msra.mxu0 0.0
    %1002 = vmatprep.subr.mxu0 0.0
    %1003 = vmatpush2.msra.mxu0 0.0
    %1004 = vmatprep.subr.mxu0 0.0
    %1005 = vmatpush2.msra.mxu0 0.0
    %1006 = vmatprep.subr.mxu0 0.0
    %1007 = vmatpush2.msra.mxu0 0.0
    %1008 = vmatprep.subr.mxu0 0.0
    %1009 = vmatpush2.msra.mxu0 0.0
    %1010 = vmatprep.subr.mxu0 0.0
    %1011 = vmatpush2.msra.mxu0 0.0
    %1012 = vmatprep.subr.mxu0 0.0
    %1013 = vmatpush2.msra.mxu0 0.0
    %1014 = vmatprep.subr.mxu0 0.0
    %1015 = vmatpush2.msra.mxu0 0.0
    %1016 = vmatprep.subr.mxu0 0.0
    %1017 = vmatpush2.msra.mxu0 0.0
    %1018 = vmatprep.mubr.f32.mxu0 0.0
    %1019 = vmatmul.mubr.f32.gmra.mxu0 %v952
    %v1020 = vpop.f32.mrf.mxu0
    %v1021 = vadd.f32 0.0, %v1020
    %v1022 = vpop.f32.mrf.mxu0
    %1023 = vdwg.mxu0
    %1024 = vmatprep.subr.mxu0 0.0
    %1025 = vmatpush1.msra.mxu0 0.0
    %1026 = vmatprep.subr.mxu0 0.0
    %1027 = vmatpush1.msra.mxu0 0.0
    %1028 = vmatprep.subr.mxu0 0.0
    %1029 = vmatpush1.msra.mxu0 0.0
    %1030 = vmatprep.subr.mxu0 0.0
    %1031 = vmatpush1.msra.mxu0 0.0
    %1032 = vmatprep.subr.mxu0 0.0
    %1033 = vmatpush1.msra.mxu0 0.0
    %1034 = vmatprep.subr.mxu0 0.0
    %1035 = vmatpush1.msra.mxu0 0.0
    %1036 = vmatprep.subr.mxu0 0.0
    %1037 = vmatpush1.msra.mxu0 0.0
    %1038 = vmatprep.subr.mxu0 0.0
    %1039 = vmatpush1.msra.mxu0 0.0
    %1040 = vmatprep.subr.mxu0 0.0
    %1041 = vmatpush1.msra.mxu0 0.0
    %1042 = vmatprep.subr.mxu0 0.0
    %1043 = vmatpush1.msra.mxu0 0.0
    %1044 = vmatprep.subr.mxu0 0.0
    %1045 = vmatpush1.msra.mxu0 0.0
    %1046 = vmatprep.subr.mxu0 0.0
    %1047 = vmatpush1.msra.mxu0 0.0
    %1048 = vmatprep.subr.mxu0 0.0
    %1049 = vmatpush1.msra.mxu0 %v48
    %1050 = vmatprep.subr.mxu0 0.0
    %1051 = vmatpush1.msra.mxu0 %v47
    %1052 = vmatprep.subr.mxu0 0.0
    %1053 = vmatpush1.msra.mxu0 %v46
    %1054 = vmatprep.subr.mxu0 0.0
    %1055 = vmatpush1.msra.mxu0 %v45
    %1056 = vmatprep.subr.mxu0 0.0
    %1057 = vmatpush2.msra.mxu0 0.0
    %1058 = vmatprep.subr.mxu0 0.0
    %1059 = vmatpush2.msra.mxu0 0.0
    %1060 = vmatprep.subr.mxu0 0.0
    %1061 = vmatpush2.msra.mxu0 0.0
    %1062 = vmatprep.subr.mxu0 0.0
    %1063 = vmatpush2.msra.mxu0 0.0
    %1064 = vmatprep.subr.mxu0 0.0
    %1065 = vmatpush2.msra.mxu0 0.0
    %1066 = vmatprep.subr.mxu0 0.0
    %1067 = vmatpush2.msra.mxu0 0.0
    %1068 = vmatprep.subr.mxu0 0.0
    %1069 = vmatpush2.msra.mxu0 0.0
    %1070 = vmatprep.subr.mxu0 0.0
    %1071 = vmatpush2.msra.mxu0 0.0
    %1072 = vmatprep.subr.mxu0 0.0
    %1073 = vmatpush2.msra.mxu0 0.0
    %1074 = vmatprep.subr.mxu0 0.0
    %1075 = vmatpush2.msra.mxu0 0.0
    %1076 = vmatprep.subr.mxu0 0.0
    %1077 = vmatpush2.msra.mxu0 0.0
    %1078 = vmatprep.subr.mxu0 0.0
    %1079 = vmatpush2.msra.mxu0 0.0
    %1080 = vmatprep.subr.mxu0 0.0
    %1081 = vmatpush2.msra.mxu0 0.0
    %1082 = vmatprep.subr.mxu0 0.0
    %1083 = vmatpush2.msra.mxu0 0.0
    %1084 = vmatprep.subr.mxu0 0.0
    %1085 = vmatpush2.msra.mxu0 0.0
    %1086 = vmatprep.subr.mxu0 0.0
    %1087 = vmatpush2.msra.mxu0 0.0
    %1088 = vmatprep.mubr.f32.mxu0 0.0
    %1089 = vmatmul.mubr.f32.gmra.mxu0 %v952
    %v1090 = vpop.f32.mrf.mxu0
    %v1091 = vadd.f32 0.0, %v1090
    %v1092 = vpop.f32.mrf.mxu0
    %1093 = vdwg.mxu0
    %s1094 = scalar_lea.vmem [#allocation2], 16
    %v1095 = vld [vmem:[%s1094] sm:$0xff]
    %v1096 = vadd.f32 %v1095, %v1021
    %v1097 = vxor.u32 %v1096, 2147483648
    %v1098 = vmul.f32 %v1097, 1.442695
    %v1099 = vpow.pop %v1098
    %v1100 = vadd.f32 %v1099, 1.0
    %v1101 = vrcp.pop %v1100
    %v1102 = vmul.f32 1.0, %v1101
    %s1103 = scalar_lea.vmem [#allocation3], 16
    %v1104 = vld [vmem:[%s1103] sm:$0xff]
    %v1105 = vadd.f32 %v1104, %v1091
    %v1106 = vxor.u32 %v1105, 2147483648
    %v1107 = vmul.f32 %v1106, 1.442695
    %v1108 = vpow.pop %v1107
    %v1109 = vadd.f32 %v1108, 1.0
    %v1110 = vrcp.pop %v1109
    %v1111 = vmul.f32 1.0, %v1110
    %s1112 = scalar_lea.vmem [#allocation4], 16
    %v1113 = vld [vmem:[%s1112] sm:$0xff]
    %1114 = vmatprep.subr.mxu0 0.0
    %1115 = vmatpush1.msra.mxu0 0.0
    %1116 = vmatprep.subr.mxu0 0.0
    %1117 = vmatpush1.msra.mxu0 0.0
    %1118 = vmatprep.subr.mxu0 0.0
    %1119 = vmatpush1.msra.mxu0 0.0
    %1120 = vmatprep.subr.mxu0 0.0
    %1121 = vmatpush1.msra.mxu0 0.0
    %1122 = vmatprep.subr.mxu0 0.0
    %1123 = vmatpush1.msra.mxu0 0.0
    %1124 = vmatprep.subr.mxu0 0.0
    %1125 = vmatpush1.msra.mxu0 0.0
    %1126 = vmatprep.subr.mxu0 0.0
    %1127 = vmatpush1.msra.mxu0 0.0
    %1128 = vmatprep.subr.mxu0 0.0
    %1129 = vmatpush1.msra.mxu0 0.0
    %1130 = vmatprep.subr.mxu0 0.0
    %1131 = vmatpush1.msra.mxu0 0.0
    %1132 = vmatprep.subr.mxu0 0.0
    %1133 = vmatpush1.msra.mxu0 0.0
    %1134 = vmatprep.subr.mxu0 0.0
    %1135 = vmatpush1.msra.mxu0 0.0
    %1136 = vmatprep.subr.mxu0 0.0
    %1137 = vmatpush1.msra.mxu0 0.0
    %1138 = vmatprep.subr.mxu0 0.0
    %1139 = vmatpush1.msra.mxu0 %v53
    %1140 = vmatprep.subr.mxu0 0.0
    %1141 = vmatpush1.msra.mxu0 %v52
    %1142 = vmatprep.subr.mxu0 0.0
    %1143 = vmatpush1.msra.mxu0 %v51
    %1144 = vmatprep.subr.mxu0 0.0
    %1145 = vmatpush1.msra.mxu0 %v50
    %1146 = vmatprep.subr.mxu0 0.0
    %1147 = vmatpush2.msra.mxu0 0.0
    %1148 = vmatprep.subr.mxu0 0.0
    %1149 = vmatpush2.msra.mxu0 0.0
    %1150 = vmatprep.subr.mxu0 0.0
    %1151 = vmatpush2.msra.mxu0 0.0
    %1152 = vmatprep.subr.mxu0 0.0
    %1153 = vmatpush2.msra.mxu0 0.0
    %1154 = vmatprep.subr.mxu0 0.0
    %1155 = vmatpush2.msra.mxu0 0.0
    %1156 = vmatprep.subr.mxu0 0.0
    %1157 = vmatpush2.msra.mxu0 0.0
    %1158 = vmatprep.subr.mxu0 0.0
    %1159 = vmatpush2.msra.mxu0 0.0
    %1160 = vmatprep.subr.mxu0 0.0
    %1161 = vmatpush2.msra.mxu0 0.0
    %1162 = vmatprep.subr.mxu0 0.0
    %1163 = vmatpush2.msra.mxu0 0.0
    %1164 = vmatprep.subr.mxu0 0.0
    %1165 = vmatpush2.msra.mxu0 0.0
    %1166 = vmatprep.subr.mxu0 0.0
    %1167 = vmatpush2.msra.mxu0 0.0
    %1168 = vmatprep.subr.mxu0 0.0
    %1169 = vmatpush2.msra.mxu0 0.0
    %1170 = vmatprep.subr.mxu0 0.0
    %1171 = vmatpush2.msra.mxu0 0.0
    %1172 = vmatprep.subr.mxu0 0.0
    %1173 = vmatpush2.msra.mxu0 0.0
    %1174 = vmatprep.subr.mxu0 0.0
    %1175 = vmatpush2.msra.mxu0 0.0
    %1176 = vmatprep.subr.mxu0 0.0
    %1177 = vmatpush2.msra.mxu0 0.0
    %1178 = vmatprep.mubr.f32.mxu0 0.0
    %1179 = vmatmul.mubr.f32.gmra.mxu0 %v952
    %v1180 = vpop.f32.mrf.mxu0
    %v1181 = vadd.f32 %v629, %v1180
    %v1182 = vpop.f32.mrf.mxu0
    %1183 = vdwg.mxu0
    %v1184 = vmul.f32 %v1102, %v1181
    %v1185 = vadd.f32 %v1113, %v1184
    %v1186 = vtanh.pop %v1185
    %v1187 = vsub.f32 1.0, %v1111
    %v1188 = vmul.f32 %v1187, %v1186
    %v1189 = vmul.f32 %v1111, %v948
    %v1190 = vadd.f32 %v1188, %v1189
    %s1191 = scalar_lea.vmem %s5, 16
    %1192 = vst.msk [vmem:[%s1191] sm:$0xff] %vm74, %v1190
    %v1194 = vsel %vm74, %v1190, 0
    %1196 = vmatprep.subr.mxu0 0.0
    %1197 = vmatpush1.msra.mxu0 0.0
    %1198 = vmatprep.subr.mxu0 0.0
    %1199 = vmatpush1.msra.mxu0 0.0
    %1200 = vmatprep.subr.mxu0 0.0
    %1201 = vmatpush1.msra.mxu0 0.0
    %1202 = vmatprep.subr.mxu0 0.0
    %1203 = vmatpush1.msra.mxu0 0.0
    %1204 = vmatprep.subr.mxu0 0.0
    %1205 = vmatpush1.msra.mxu0 0.0
    %1206 = vmatprep.subr.mxu0 0.0
    %1207 = vmatpush1.msra.mxu0 0.0
    %1208 = vmatprep.subr.mxu0 0.0
    %1209 = vmatpush1.msra.mxu0 0.0
    %1210 = vmatprep.subr.mxu0 0.0
    %1211 = vmatpush1.msra.mxu0 0.0
    %1212 = vmatprep.subr.mxu0 0.0
    %1213 = vmatpush1.msra.mxu0 0.0
    %1214 = vmatprep.subr.mxu0 0.0
    %1215 = vmatpush1.msra.mxu0 0.0
    %1216 = vmatprep.subr.mxu0 0.0
    %1217 = vmatpush1.msra.mxu0 0.0
    %1218 = vmatprep.subr.mxu0 0.0
    %1219 = vmatpush1.msra.mxu0 0.0
    %1220 = vmatprep.subr.mxu0 0.0
    %1221 = vmatpush1.msra.mxu0 %v43
    %1222 = vmatprep.subr.mxu0 0.0
    %1223 = vmatpush1.msra.mxu0 %v42
    %1224 = vmatprep.subr.mxu0 0.0
    %1225 = vmatpush1.msra.mxu0 %v41
    %1226 = vmatprep.subr.mxu0 0.0
    %1227 = vmatpush1.msra.mxu0 %v40
    %1228 = vmatprep.subr.mxu0 0.0
    %1229 = vmatpush2.msra.mxu0 0.0
    %1230 = vmatprep.subr.mxu0 0.0
    %1231 = vmatpush2.msra.mxu0 0.0
    %1232 = vmatprep.subr.mxu0 0.0
    %1233 = vmatpush2.msra.mxu0 0.0
    %1234 = vmatprep.subr.mxu0 0.0
    %1235 = vmatpush2.msra.mxu0 0.0
    %1236 = vmatprep.subr.mxu0 0.0
    %1237 = vmatpush2.msra.mxu0 0.0
    %1238 = vmatprep.subr.mxu0 0.0
    %1239 = vmatpush2.msra.mxu0 0.0
    %1240 = vmatprep.subr.mxu0 0.0
    %1241 = vmatpush2.msra.mxu0 0.0
    %1242 = vmatprep.subr.mxu0 0.0
    %1243 = vmatpush2.msra.mxu0 0.0
    %1244 = vmatprep.subr.mxu0 0.0
    %1245 = vmatpush2.msra.mxu0 0.0
    %1246 = vmatprep.subr.mxu0 0.0
    %1247 = vmatpush2.msra.mxu0 0.0
    %1248 = vmatprep.subr.mxu0 0.0
    %1249 = vmatpush2.msra.mxu0 0.0
    %1250 = vmatprep.subr.mxu0 0.0
    %1251 = vmatpush2.msra.mxu0 0.0
    %1252 = vmatprep.subr.mxu0 0.0
    %1253 = vmatpush2.msra.mxu0 0.0
    %1254 = vmatprep.subr.mxu0 0.0
    %1255 = vmatpush2.msra.mxu0 0.0
    %1256 = vmatprep.subr.mxu0 0.0
    %1257 = vmatpush2.msra.mxu0 0.0
    %1258 = vmatprep.subr.mxu0 0.0
    %1259 = vmatpush2.msra.mxu0 0.0
    %1260 = vmatprep.mubr.f32.mxu0 0.0
    %1261 = vmatmul.mubr.f32.gmra.mxu0 %v1194
    %v1262 = vpop.f32.mrf.mxu0
    %v1263 = vadd.f32 0.0, %v1262
    %v1264 = vpop.f32.mrf.mxu0
    %1265 = vdwg.mxu0
    %1266 = vmatprep.subr.mxu0 0.0
    %1267 = vmatpush1.msra.mxu0 0.0
    %1268 = vmatprep.subr.mxu0 0.0
    %1269 = vmatpush1.msra.mxu0 0.0
    %1270 = vmatprep.subr.mxu0 0.0
    %1271 = vmatpush1.msra.mxu0 0.0
    %1272 = vmatprep.subr.mxu0 0.0
    %1273 = vmatpush1.msra.mxu0 0.0
    %1274 = vmatprep.subr.mxu0 0.0
    %1275 = vmatpush1.msra.mxu0 0.0
    %1276 = vmatprep.subr.mxu0 0.0
    %1277 = vmatpush1.msra.mxu0 0.0
    %1278 = vmatprep.subr.mxu0 0.0
    %1279 = vmatpush1.msra.mxu0 0.0
    %1280 = vmatprep.subr.mxu0 0.0
    %1281 = vmatpush1.msra.mxu0 0.0
    %1282 = vmatprep.subr.mxu0 0.0
    %1283 = vmatpush1.msra.mxu0 0.0
    %1284 = vmatprep.subr.mxu0 0.0
    %1285 = vmatpush1.msra.mxu0 0.0
    %1286 = vmatprep.subr.mxu0 0.0
    %1287 = vmatpush1.msra.mxu0 0.0
    %1288 = vmatprep.subr.mxu0 0.0
    %1289 = vmatpush1.msra.mxu0 0.0
    %1290 = vmatprep.subr.mxu0 0.0
    %1291 = vmatpush1.msra.mxu0 %v48
    %1292 = vmatprep.subr.mxu0 0.0
    %1293 = vmatpush1.msra.mxu0 %v47
    %1294 = vmatprep.subr.mxu0 0.0
    %1295 = vmatpush1.msra.mxu0 %v46
    %1296 = vmatprep.subr.mxu0 0.0
    %1297 = vmatpush1.msra.mxu0 %v45
    %1298 = vmatprep.subr.mxu0 0.0
    %1299 = vmatpush2.msra.mxu0 0.0
    %1300 = vmatprep.subr.mxu0 0.0
    %1301 = vmatpush2.msra.mxu0 0.0
    %1302 = vmatprep.subr.mxu0 0.0
    %1303 = vmatpush2.msra.mxu0 0.0
    %1304 = vmatprep.subr.mxu0 0.0
    %1305 = vmatpush2.msra.mxu0 0.0
    %1306 = vmatprep.subr.mxu0 0.0
    %1307 = vmatpush2.msra.mxu0 0.0
    %1308 = vmatprep.subr.mxu0 0.0
    %1309 = vmatpush2.msra.mxu0 0.0
    %1310 = vmatprep.subr.mxu0 0.0
    %1311 = vmatpush2.msra.mxu0 0.0
    %1312 = vmatprep.subr.mxu0 0.0
    %1313 = vmatpush2.msra.mxu0 0.0
    %1314 = vmatprep.subr.mxu0 0.0
    %1315 = vmatpush2.msra.mxu0 0.0
    %1316 = vmatprep.subr.mxu0 0.0
    %1317 = vmatpush2.msra.mxu0 0.0
    %1318 = vmatprep.subr.mxu0 0.0
    %1319 = vmatpush2.msra.mxu0 0.0
    %1320 = vmatprep.subr.mxu0 0.0
    %1321 = vmatpush2.msra.mxu0 0.0
    %1322 = vmatprep.subr.mxu0 0.0
    %1323 = vmatpush2.msra.mxu0 0.0
    %1324 = vmatprep.subr.mxu0 0.0
    %1325 = vmatpush2.msra.mxu0 0.0
    %1326 = vmatprep.subr.mxu0 0.0
    %1327 = vmatpush2.msra.mxu0 0.0
    %1328 = vmatprep.subr.mxu0 0.0
    %1329 = vmatpush2.msra.mxu0 0.0
    %1330 = vmatprep.mubr.f32.mxu0 0.0
    %1331 = vmatmul.mubr.f32.gmra.mxu0 %v1194
    %v1332 = vpop.f32.mrf.mxu0
    %v1333 = vadd.f32 0.0, %v1332
    %v1334 = vpop.f32.mrf.mxu0
    %1335 = vdwg.mxu0
    %s1336 = scalar_lea.vmem [#allocation2], 24
    %v1337 = vld [vmem:[%s1336] sm:$0xff]
    %v1338 = vadd.f32 %v1337, %v1263
    %v1339 = vxor.u32 %v1338, 2147483648
    %v1340 = vmul.f32 %v1339, 1.442695
    %v1341 = vpow.pop %v1340
    %v1342 = vadd.f32 %v1341, 1.0
    %v1343 = vrcp.pop %v1342
    %v1344 = vmul.f32 1.0, %v1343
    %s1345 = scalar_lea.vmem [#allocation3], 24
    %v1346 = vld [vmem:[%s1345] sm:$0xff]
    %v1347 = vadd.f32 %v1346, %v1333
    %v1348 = vxor.u32 %v1347, 2147483648
    %v1349 = vmul.f32 %v1348, 1.442695
    %v1350 = vpow.pop %v1349
    %v1351 = vadd.f32 %v1350, 1.0
    %v1352 = vrcp.pop %v1351
    %v1353 = vmul.f32 1.0, %v1352
    %s1354 = scalar_lea.vmem [#allocation4], 24
    %v1355 = vld [vmem:[%s1354] sm:$0xff]
    %1356 = vmatprep.subr.mxu0 0.0
    %1357 = vmatpush1.msra.mxu0 0.0
    %1358 = vmatprep.subr.mxu0 0.0
    %1359 = vmatpush1.msra.mxu0 0.0
    %1360 = vmatprep.subr.mxu0 0.0
    %1361 = vmatpush1.msra.mxu0 0.0
    %1362 = vmatprep.subr.mxu0 0.0
    %1363 = vmatpush1.msra.mxu0 0.0
    %1364 = vmatprep.subr.mxu0 0.0
    %1365 = vmatpush1.msra.mxu0 0.0
    %1366 = vmatprep.subr.mxu0 0.0
    %1367 = vmatpush1.msra.mxu0 0.0
    %1368 = vmatprep.subr.mxu0 0.0
    %1369 = vmatpush1.msra.mxu0 0.0
    %1370 = vmatprep.subr.mxu0 0.0
    %1371 = vmatpush1.msra.mxu0 0.0
    %1372 = vmatprep.subr.mxu0 0.0
    %1373 = vmatpush1.msra.mxu0 0.0
    %1374 = vmatprep.subr.mxu0 0.0
    %1375 = vmatpush1.msra.mxu0 0.0
    %1376 = vmatprep.subr.mxu0 0.0
    %1377 = vmatpush1.msra.mxu0 0.0
    %1378 = vmatprep.subr.mxu0 0.0
    %1379 = vmatpush1.msra.mxu0 0.0
    %1380 = vmatprep.subr.mxu0 0.0
    %1381 = vmatpush1.msra.mxu0 %v53
    %1382 = vmatprep.subr.mxu0 0.0
    %1383 = vmatpush1.msra.mxu0 %v52
    %1384 = vmatprep.subr.mxu0 0.0
    %1385 = vmatpush1.msra.mxu0 %v51
    %1386 = vmatprep.subr.mxu0 0.0
    %1387 = vmatpush1.msra.mxu0 %v50
    %1388 = vmatprep.subr.mxu0 0.0
    %1389 = vmatpush2.msra.mxu0 0.0
    %1390 = vmatprep.subr.mxu0 0.0
    %1391 = vmatpush2.msra.mxu0 0.0
    %1392 = vmatprep.subr.mxu0 0.0
    %1393 = vmatpush2.msra.mxu0 0.0
    %1394 = vmatprep.subr.mxu0 0.0
    %1395 = vmatpush2.msra.mxu0 0.0
    %1396 = vmatprep.subr.mxu0 0.0
    %1397 = vmatpush2.msra.mxu0 0.0
    %1398 = vmatprep.subr.mxu0 0.0
    %1399 = vmatpush2.msra.mxu0 0.0
    %1400 = vmatprep.subr.mxu0 0.0
    %1401 = vmatpush2.msra.mxu0 0.0
    %1402 = vmatprep.subr.mxu0 0.0
    %1403 = vmatpush2.msra.mxu0 0.0
    %1404 = vmatprep.subr.mxu0 0.0
    %1405 = vmatpush2.msra.mxu0 0.0
    %1406 = vmatprep.subr.mxu0 0.0
    %1407 = vmatpush2.msra.mxu0 0.0
    %1408 = vmatprep.subr.mxu0 0.0
    %1409 = vmatpush2.msra.mxu0 0.0
    %1410 = vmatprep.subr.mxu0 0.0
    %1411 = vmatpush2.msra.mxu0 0.0
    %1412 = vmatprep.subr.mxu0 0.0
    %1413 = vmatpush2.msra.mxu0 0.0
    %1414 = vmatprep.subr.mxu0 0.0
    %1415 = vmatpush2.msra.mxu0 0.0
    %1416 = vmatprep.subr.mxu0 0.0
    %1417 = vmatpush2.msra.mxu0 0.0
    %1418 = vmatprep.subr.mxu0 0.0
    %1419 = vmatpush2.msra.mxu0 0.0
    %1420 = vmatprep.mubr.f32.mxu0 0.0
    %1421 = vmatmul.mubr.f32.gmra.mxu0 %v1194
    %v1422 = vpop.f32.mrf.mxu0
    %v1423 = vadd.f32 %v629, %v1422
    %v1424 = vpop.f32.mrf.mxu0
    %1425 = vdwg.mxu0
    %v1426 = vmul.f32 %v1344, %v1423
    %v1427 = vadd.f32 %v1355, %v1426
    %v1428 = vtanh.pop %v1427
    %v1429 = vsub.f32 1.0, %v1353
    %v1430 = vmul.f32 %v1429, %v1428
    %v1431 = vmul.f32 %v1353, %v1190
    %v1432 = vadd.f32 %v1430, %v1431
    %s1433 = scalar_lea.vmem %s5, 24
    %1434 = vst.msk [vmem:[%s1433] sm:$0xff] %vm74, %v1432
    %v1436 = vsel %vm74, %v1432, 0
    %1438 = vmatprep.subr.mxu0 0.0
    %1439 = vmatpush1.msra.mxu0 0.0
    %1440 = vmatprep.subr.mxu0 0.0
    %1441 = vmatpush1.msra.mxu0 0.0
    %1442 = vmatprep.subr.mxu0 0.0
    %1443 = vmatpush1.msra.mxu0 0.0
    %1444 = vmatprep.subr.mxu0 0.0
    %1445 = vmatpush1.msra.mxu0 0.0
    %1446 = vmatprep.subr.mxu0 0.0
    %1447 = vmatpush1.msra.mxu0 0.0
    %1448 = vmatprep.subr.mxu0 0.0
    %1449 = vmatpush1.msra.mxu0 0.0
    %1450 = vmatprep.subr.mxu0 0.0
    %1451 = vmatpush1.msra.mxu0 0.0
    %1452 = vmatprep.subr.mxu0 0.0
    %1453 = vmatpush1.msra.mxu0 0.0
    %1454 = vmatprep.subr.mxu0 0.0
    %1455 = vmatpush1.msra.mxu0 0.0
    %1456 = vmatprep.subr.mxu0 0.0
    %1457 = vmatpush1.msra.mxu0 0.0
    %1458 = vmatprep.subr.mxu0 0.0
    %1459 = vmatpush1.msra.mxu0 0.0
    %1460 = vmatprep.subr.mxu0 0.0
    %1461 = vmatpush1.msra.mxu0 0.0
    %1462 = vmatprep.subr.mxu0 0.0
    %1463 = vmatpush1.msra.mxu0 %v43
    %1464 = vmatprep.subr.mxu0 0.0
    %1465 = vmatpush1.msra.mxu0 %v42
    %1466 = vmatprep.subr.mxu0 0.0
    %1467 = vmatpush1.msra.mxu0 %v41
    %1468 = vmatprep.subr.mxu0 0.0
    %1469 = vmatpush1.msra.mxu0 %v40
    %1470 = vmatprep.subr.mxu0 0.0
    %1471 = vmatpush2.msra.mxu0 0.0
    %1472 = vmatprep.subr.mxu0 0.0
    %1473 = vmatpush2.msra.mxu0 0.0
    %1474 = vmatprep.subr.mxu0 0.0
    %1475 = vmatpush2.msra.mxu0 0.0
    %1476 = vmatprep.subr.mxu0 0.0
    %1477 = vmatpush2.msra.mxu0 0.0
    %1478 = vmatprep.subr.mxu0 0.0
    %1479 = vmatpush2.msra.mxu0 0.0
    %1480 = vmatprep.subr.mxu0 0.0
    %1481 = vmatpush2.msra.mxu0 0.0
    %1482 = vmatprep.subr.mxu0 0.0
    %1483 = vmatpush2.msra.mxu0 0.0
    %1484 = vmatprep.subr.mxu0 0.0
    %1485 = vmatpush2.msra.mxu0 0.0
    %1486 = vmatprep.subr.mxu0 0.0
    %1487 = vmatpush2.msra.mxu0 0.0
    %1488 = vmatprep.subr.mxu0 0.0
    %1489 = vmatpush2.msra.mxu0 0.0
    %1490 = vmatprep.subr.mxu0 0.0
    %1491 = vmatpush2.msra.mxu0 0.0
    %1492 = vmatprep.subr.mxu0 0.0
    %1493 = vmatpush2.msra.mxu0 0.0
    %1494 = vmatprep.subr.mxu0 0.0
    %1495 = vmatpush2.msra.mxu0 0.0
    %1496 = vmatprep.subr.mxu0 0.0
    %1497 = vmatpush2.msra.mxu0 0.0
    %1498 = vmatprep.subr.mxu0 0.0
    %1499 = vmatpush2.msra.mxu0 0.0
    %1500 = vmatprep.subr.mxu0 0.0
    %1501 = vmatpush2.msra.mxu0 0.0
    %1502 = vmatprep.mubr.f32.mxu0 0.0
    %1503 = vmatmul.mubr.f32.gmra.mxu0 %v1436
    %v1504 = vpop.f32.mrf.mxu0
    %v1505 = vadd.f32 0.0, %v1504
    %v1506 = vpop.f32.mrf.mxu0
    %1507 = vdwg.mxu0
    %1508 = vmatprep.subr.mxu0 0.0
    %1509 = vmatpush1.msra.mxu0 0.0
    %1510 = vmatprep.subr.mxu0 0.0
    %1511 = vmatpush1.msra.mxu0 0.0
    %1512 = vmatprep.subr.mxu0 0.0
    %1513 = vmatpush1.msra.mxu0 0.0
    %1514 = vmatprep.subr.mxu0 0.0
    %1515 = vmatpush1.msra.mxu0 0.0
    %1516 = vmatprep.subr.mxu0 0.0
    %1517 = vmatpush1.msra.mxu0 0.0
    %1518 = vmatprep.subr.mxu0 0.0
    %1519 = vmatpush1.msra.mxu0 0.0
    %1520 = vmatprep.subr.mxu0 0.0
    %1521 = vmatpush1.msra.mxu0 0.0
    %1522 = vmatprep.subr.mxu0 0.0
    %1523 = vmatpush1.msra.mxu0 0.0
    %1524 = vmatprep.subr.mxu0 0.0
    %1525 = vmatpush1.msra.mxu0 0.0
    %1526 = vmatprep.subr.mxu0 0.0
    %1527 = vmatpush1.msra.mxu0 0.0
    %1528 = vmatprep.subr.mxu0 0.0
    %1529 = vmatpush1.msra.mxu0 0.0
    %1530 = vmatprep.subr.mxu0 0.0
    %1531 = vmatpush1.msra.mxu0 0.0
    %1532 = vmatprep.subr.mxu0 0.0
    %1533 = vmatpush1.msra.mxu0 %v48
    %1534 = vmatprep.subr.mxu0 0.0
    %1535 = vmatpush1.msra.mxu0 %v47
    %1536 = vmatprep.subr.mxu0 0.0
    %1537 = vmatpush1.msra.mxu0 %v46
    %1538 = vmatprep.subr.mxu0 0.0
    %1539 = vmatpush1.msra.mxu0 %v45
    %1540 = vmatprep.subr.mxu0 0.0
    %1541 = vmatpush2.msra.mxu0 0.0
    %1542 = vmatprep.subr.mxu0 0.0
    %1543 = vmatpush2.msra.mxu0 0.0
    %1544 = vmatprep.subr.mxu0 0.0
    %1545 = vmatpush2.msra.mxu0 0.0
    %1546 = vmatprep.subr.mxu0 0.0
    %1547 = vmatpush2.msra.mxu0 0.0
    %1548 = vmatprep.subr.mxu0 0.0
    %1549 = vmatpush2.msra.mxu0 0.0
    %1550 = vmatprep.subr.mxu0 0.0
    %1551 = vmatpush2.msra.mxu0 0.0
    %1552 = vmatprep.subr.mxu0 0.0
    %1553 = vmatpush2.msra.mxu0 0.0
    %1554 = vmatprep.subr.mxu0 0.0
    %1555 = vmatpush2.msra.mxu0 0.0
    %1556 = vmatprep.subr.mxu0 0.0
    %1557 = vmatpush2.msra.mxu0 0.0
    %1558 = vmatprep.subr.mxu0 0.0
    %1559 = vmatpush2.msra.mxu0 0.0
    %1560 = vmatprep.subr.mxu0 0.0
    %1561 = vmatpush2.msra.mxu0 0.0
    %1562 = vmatprep.subr.mxu0 0.0
    %1563 = vmatpush2.msra.mxu0 0.0
    %1564 = vmatprep.subr.mxu0 0.0
    %1565 = vmatpush2.msra.mxu0 0.0
    %1566 = vmatprep.subr.mxu0 0.0
    %1567 = vmatpush2.msra.mxu0 0.0
    %1568 = vmatprep.subr.mxu0 0.0
    %1569 = vmatpush2.msra.mxu0 0.0
    %1570 = vmatprep.subr.mxu0 0.0
    %1571 = vmatpush2.msra.mxu0 0.0
    %1572 = vmatprep.mubr.f32.mxu0 0.0
    %1573 = vmatmul.mubr.f32.gmra.mxu0 %v1436
    %v1574 = vpop.f32.mrf.mxu0
    %v1575 = vadd.f32 0.0, %v1574
    %v1576 = vpop.f32.mrf.mxu0
    %1577 = vdwg.mxu0
    %s1578 = scalar_lea.vmem [#allocation2], 32
    %v1579 = vld [vmem:[%s1578] sm:$0xff]
    %v1580 = vadd.f32 %v1579, %v1505
    %v1581 = vxor.u32 %v1580, 2147483648
    %v1582 = vmul.f32 %v1581, 1.442695
    %v1583 = vpow.pop %v1582
    %v1584 = vadd.f32 %v1583, 1.0
    %v1585 = vrcp.pop %v1584
    %v1586 = vmul.f32 1.0, %v1585
    %s1587 = scalar_lea.vmem [#allocation3], 32
    %v1588 = vld [vmem:[%s1587] sm:$0xff]
    %v1589 = vadd.f32 %v1588, %v1575
    %v1590 = vxor.u32 %v1589, 2147483648
    %v1591 = vmul.f32 %v1590, 1.442695
    %v1592 = vpow.pop %v1591
    %v1593 = vadd.f32 %v1592, 1.0
    %v1594 = vrcp.pop %v1593
    %v1595 = vmul.f32 1.0, %v1594
    %s1596 = scalar_lea.vmem [#allocation4], 32
    %v1597 = vld [vmem:[%s1596] sm:$0xff]
    %1598 = vmatprep.subr.mxu0 0.0
    %1599 = vmatpush1.msra.mxu0 0.0
    %1600 = vmatprep.subr.mxu0 0.0
    %1601 = vmatpush1.msra.mxu0 0.0
    %1602 = vmatprep.subr.mxu0 0.0
    %1603 = vmatpush1.msra.mxu0 0.0
    %1604 = vmatprep.subr.mxu0 0.0
    %1605 = vmatpush1.msra.mxu0 0.0
    %1606 = vmatprep.subr.mxu0 0.0
    %1607 = vmatpush1.msra.mxu0 0.0
    %1608 = vmatprep.subr.mxu0 0.0
    %1609 = vmatpush1.msra.mxu0 0.0
    %1610 = vmatprep.subr.mxu0 0.0
    %1611 = vmatpush1.msra.mxu0 0.0
    %1612 = vmatprep.subr.mxu0 0.0
    %1613 = vmatpush1.msra.mxu0 0.0
    %1614 = vmatprep.subr.mxu0 0.0
    %1615 = vmatpush1.msra.mxu0 0.0
    %1616 = vmatprep.subr.mxu0 0.0
    %1617 = vmatpush1.msra.mxu0 0.0
    %1618 = vmatprep.subr.mxu0 0.0
    %1619 = vmatpush1.msra.mxu0 0.0
    %1620 = vmatprep.subr.mxu0 0.0
    %1621 = vmatpush1.msra.mxu0 0.0
    %1622 = vmatprep.subr.mxu0 0.0
    %1623 = vmatpush1.msra.mxu0 %v53
    %1624 = vmatprep.subr.mxu0 0.0
    %1625 = vmatpush1.msra.mxu0 %v52
    %1626 = vmatprep.subr.mxu0 0.0
    %1627 = vmatpush1.msra.mxu0 %v51
    %1628 = vmatprep.subr.mxu0 0.0
    %1629 = vmatpush1.msra.mxu0 %v50
    %1630 = vmatprep.subr.mxu0 0.0
    %1631 = vmatpush2.msra.mxu0 0.0
    %1632 = vmatprep.subr.mxu0 0.0
    %1633 = vmatpush2.msra.mxu0 0.0
    %1634 = vmatprep.subr.mxu0 0.0
    %1635 = vmatpush2.msra.mxu0 0.0
    %1636 = vmatprep.subr.mxu0 0.0
    %1637 = vmatpush2.msra.mxu0 0.0
    %1638 = vmatprep.subr.mxu0 0.0
    %1639 = vmatpush2.msra.mxu0 0.0
    %1640 = vmatprep.subr.mxu0 0.0
    %1641 = vmatpush2.msra.mxu0 0.0
    %1642 = vmatprep.subr.mxu0 0.0
    %1643 = vmatpush2.msra.mxu0 0.0
    %1644 = vmatprep.subr.mxu0 0.0
    %1645 = vmatpush2.msra.mxu0 0.0
    %1646 = vmatprep.subr.mxu0 0.0
    %1647 = vmatpush2.msra.mxu0 0.0
    %1648 = vmatprep.subr.mxu0 0.0
    %1649 = vmatpush2.msra.mxu0 0.0
    %1650 = vmatprep.subr.mxu0 0.0
    %1651 = vmatpush2.msra.mxu0 0.0
    %1652 = vmatprep.subr.mxu0 0.0
    %1653 = vmatpush2.msra.mxu0 0.0
    %1654 = vmatprep.subr.mxu0 0.0
    %1655 = vmatpush2.msra.mxu0 0.0
    %1656 = vmatprep.subr.mxu0 0.0
    %1657 = vmatpush2.msra.mxu0 0.0
    %1658 = vmatprep.subr.mxu0 0.0
    %1659 = vmatpush2.msra.mxu0 0.0
    %1660 = vmatprep.subr.mxu0 0.0
    %1661 = vmatpush2.msra.mxu0 0.0
    %1662 = vmatprep.mubr.f32.mxu0 0.0
    %1663 = vmatmul.mubr.f32.gmra.mxu0 %v1436
    %v1664 = vpop.f32.mrf.mxu0
    %v1665 = vadd.f32 %v629, %v1664
    %v1666 = vpop.f32.mrf.mxu0
    %1667 = vdwg.mxu0
    %v1668 = vmul.f32 %v1586, %v1665
    %v1669 = vadd.f32 %v1597, %v1668
    %v1670 = vtanh.pop %v1669
    %v1671 = vsub.f32 1.0, %v1595
    %v1672 = vmul.f32 %v1671, %v1670
    %v1673 = vmul.f32 %v1595, %v1432
    %v1674 = vadd.f32 %v1672, %v1673
    %s1675 = scalar_lea.vmem %s5, 32
    %1676 = vst.msk [vmem:[%s1675] sm:$0xff] %vm74, %v1674
    %v1678 = vsel %vm74, %v1674, 0
    %1680 = vmatprep.subr.mxu0 0.0
    %1681 = vmatpush1.msra.mxu0 0.0
    %1682 = vmatprep.subr.mxu0 0.0
    %1683 = vmatpush1.msra.mxu0 0.0
    %1684 = vmatprep.subr.mxu0 0.0
    %1685 = vmatpush1.msra.mxu0 0.0
    %1686 = vmatprep.subr.mxu0 0.0
    %1687 = vmatpush1.msra.mxu0 0.0
    %1688 = vmatprep.subr.mxu0 0.0
    %1689 = vmatpush1.msra.mxu0 0.0
    %1690 = vmatprep.subr.mxu0 0.0
    %1691 = vmatpush1.msra.mxu0 0.0
    %1692 = vmatprep.subr.mxu0 0.0
    %1693 = vmatpush1.msra.mxu0 0.0
    %1694 = vmatprep.subr.mxu0 0.0
    %1695 = vmatpush1.msra.mxu0 0.0
    %1696 = vmatprep.subr.mxu0 0.0
    %1697 = vmatpush1.msra.mxu0 0.0
    %1698 = vmatprep.subr.mxu0 0.0
    %1699 = vmatpush1.msra.mxu0 0.0
    %1700 = vmatprep.subr.mxu0 0.0
    %1701 = vmatpush1.msra.mxu0 0.0
    %1702 = vmatprep.subr.mxu0 0.0
    %1703 = vmatpush1.msra.mxu0 0.0
    %1704 = vmatprep.subr.mxu0 0.0
    %1705 = vmatpush1.msra.mxu0 %v43
    %1706 = vmatprep.subr.mxu0 0.0
    %1707 = vmatpush1.msra.mxu0 %v42
    %1708 = vmatprep.subr.mxu0 0.0
    %1709 = vmatpush1.msra.mxu0 %v41
    %1710 = vmatprep.subr.mxu0 0.0
    %1711 = vmatpush1.msra.mxu0 %v40
    %1712 = vmatprep.subr.mxu0 0.0
    %1713 = vmatpush2.msra.mxu0 0.0
    %1714 = vmatprep.subr.mxu0 0.0
    %1715 = vmatpush2.msra.mxu0 0.0
    %1716 = vmatprep.subr.mxu0 0.0
    %1717 = vmatpush2.msra.mxu0 0.0
    %1718 = vmatprep.subr.mxu0 0.0
    %1719 = vmatpush2.msra.mxu0 0.0
    %1720 = vmatprep.subr.mxu0 0.0
    %1721 = vmatpush2.msra.mxu0 0.0
    %1722 = vmatprep.subr.mxu0 0.0
    %1723 = vmatpush2.msra.mxu0 0.0
    %1724 = vmatprep.subr.mxu0 0.0
    %1725 = vmatpush2.msra.mxu0 0.0
    %1726 = vmatprep.subr.mxu0 0.0
    %1727 = vmatpush2.msra.mxu0 0.0
    %1728 = vmatprep.subr.mxu0 0.0
    %1729 = vmatpush2.msra.mxu0 0.0
    %1730 = vmatprep.subr.mxu0 0.0
    %1731 = vmatpush2.msra.mxu0 0.0
    %1732 = vmatprep.subr.mxu0 0.0
    %1733 = vmatpush2.msra.mxu0 0.0
    %1734 = vmatprep.subr.mxu0 0.0
    %1735 = vmatpush2.msra.mxu0 0.0
    %1736 = vmatprep.subr.mxu0 0.0
    %1737 = vmatpush2.msra.mxu0 0.0
    %1738 = vmatprep.subr.mxu0 0.0
    %1739 = vmatpush2.msra.mxu0 0.0
    %1740 = vmatprep.subr.mxu0 0.0
    %1741 = vmatpush2.msra.mxu0 0.0
    %1742 = vmatprep.subr.mxu0 0.0
    %1743 = vmatpush2.msra.mxu0 0.0
    %1744 = vmatprep.mubr.f32.mxu0 0.0
    %1745 = vmatmul.mubr.f32.gmra.mxu0 %v1678
    %v1746 = vpop.f32.mrf.mxu0
    %v1747 = vadd.f32 0.0, %v1746
    %v1748 = vpop.f32.mrf.mxu0
    %1749 = vdwg.mxu0
    %1750 = vmatprep.subr.mxu0 0.0
    %1751 = vmatpush1.msra.mxu0 0.0
    %1752 = vmatprep.subr.mxu0 0.0
    %1753 = vmatpush1.msra.mxu0 0.0
    %1754 = vmatprep.subr.mxu0 0.0
    %1755 = vmatpush1.msra.mxu0 0.0
    %1756 = vmatprep.subr.mxu0 0.0
    %1757 = vmatpush1.msra.mxu0 0.0
    %1758 = vmatprep.subr.mxu0 0.0
    %1759 = vmatpush1.msra.mxu0 0.0
    %1760 = vmatprep.subr.mxu0 0.0
    %1761 = vmatpush1.msra.mxu0 0.0
    %1762 = vmatprep.subr.mxu0 0.0
    %1763 = vmatpush1.msra.mxu0 0.0
    %1764 = vmatprep.subr.mxu0 0.0
    %1765 = vmatpush1.msra.mxu0 0.0
    %1766 = vmatprep.subr.mxu0 0.0
    %1767 = vmatpush1.msra.mxu0 0.0
    %1768 = vmatprep.subr.mxu0 0.0
    %1769 = vmatpush1.msra.mxu0 0.0
    %1770 = vmatprep.subr.mxu0 0.0
    %1771 = vmatpush1.msra.mxu0 0.0
    %1772 = vmatprep.subr.mxu0 0.0
    %1773 = vmatpush1.msra.mxu0 0.0
    %1774 = vmatprep.subr.mxu0 0.0
    %1775 = vmatpush1.msra.mxu0 %v48
    %1776 = vmatprep.subr.mxu0 0.0
    %1777 = vmatpush1.msra.mxu0 %v47
    %1778 = vmatprep.subr.mxu0 0.0
    %1779 = vmatpush1.msra.mxu0 %v46
    %1780 = vmatprep.subr.mxu0 0.0
    %1781 = vmatpush1.msra.mxu0 %v45
    %1782 = vmatprep.subr.mxu0 0.0
    %1783 = vmatpush2.msra.mxu0 0.0
    %1784 = vmatprep.subr.mxu0 0.0
    %1785 = vmatpush2.msra.mxu0 0.0
    %1786 = vmatprep.subr.mxu0 0.0
    %1787 = vmatpush2.msra.mxu0 0.0
    %1788 = vmatprep.subr.mxu0 0.0
    %1789 = vmatpush2.msra.mxu0 0.0
    %1790 = vmatprep.subr.mxu0 0.0
    %1791 = vmatpush2.msra.mxu0 0.0
    %1792 = vmatprep.subr.mxu0 0.0
    %1793 = vmatpush2.msra.mxu0 0.0
    %1794 = vmatprep.subr.mxu0 0.0
    %1795 = vmatpush2.msra.mxu0 0.0
    %1796 = vmatprep.subr.mxu0 0.0
    %1797 = vmatpush2.msra.mxu0 0.0
    %1798 = vmatprep.subr.mxu0 0.0
    %1799 = vmatpush2.msra.mxu0 0.0
    %1800 = vmatprep.subr.mxu0 0.0
    %1801 = vmatpush2.msra.mxu0 0.0
    %1802 = vmatprep.subr.mxu0 0.0
    %1803 = vmatpush2.msra.mxu0 0.0
    %1804 = vmatprep.subr.mxu0 0.0
    %1805 = vmatpush2.msra.mxu0 0.0
    %1806 = vmatprep.subr.mxu0 0.0
    %1807 = vmatpush2.msra.mxu0 0.0
    %1808 = vmatprep.subr.mxu0 0.0
    %1809 = vmatpush2.msra.mxu0 0.0
    %1810 = vmatprep.subr.mxu0 0.0
    %1811 = vmatpush2.msra.mxu0 0.0
    %1812 = vmatprep.subr.mxu0 0.0
    %1813 = vmatpush2.msra.mxu0 0.0
    %1814 = vmatprep.mubr.f32.mxu0 0.0
    %1815 = vmatmul.mubr.f32.gmra.mxu0 %v1678
    %v1816 = vpop.f32.mrf.mxu0
    %v1817 = vadd.f32 0.0, %v1816
    %v1818 = vpop.f32.mrf.mxu0
    %1819 = vdwg.mxu0
    %s1820 = scalar_lea.vmem [#allocation2], 40
    %v1821 = vld [vmem:[%s1820] sm:$0xff]
    %v1822 = vadd.f32 %v1821, %v1747
    %v1823 = vxor.u32 %v1822, 2147483648
    %v1824 = vmul.f32 %v1823, 1.442695
    %v1825 = vpow.pop %v1824
    %v1826 = vadd.f32 %v1825, 1.0
    %v1827 = vrcp.pop %v1826
    %v1828 = vmul.f32 1.0, %v1827
    %s1829 = scalar_lea.vmem [#allocation3], 40
    %v1830 = vld [vmem:[%s1829] sm:$0xff]
    %v1831 = vadd.f32 %v1830, %v1817
    %v1832 = vxor.u32 %v1831, 2147483648
    %v1833 = vmul.f32 %v1832, 1.442695
    %v1834 = vpow.pop %v1833
    %v1835 = vadd.f32 %v1834, 1.0
    %v1836 = vrcp.pop %v1835
    %v1837 = vmul.f32 1.0, %v1836
    %s1838 = scalar_lea.vmem [#allocation4], 40
    %v1839 = vld [vmem:[%s1838] sm:$0xff]
    %1840 = vmatprep.subr.mxu0 0.0
    %1841 = vmatpush1.msra.mxu0 0.0
    %1842 = vmatprep.subr.mxu0 0.0
    %1843 = vmatpush1.msra.mxu0 0.0
    %1844 = vmatprep.subr.mxu0 0.0
    %1845 = vmatpush1.msra.mxu0 0.0
    %1846 = vmatprep.subr.mxu0 0.0
    %1847 = vmatpush1.msra.mxu0 0.0
    %1848 = vmatprep.subr.mxu0 0.0
    %1849 = vmatpush1.msra.mxu0 0.0
    %1850 = vmatprep.subr.mxu0 0.0
    %1851 = vmatpush1.msra.mxu0 0.0
    %1852 = vmatprep.subr.mxu0 0.0
    %1853 = vmatpush1.msra.mxu0 0.0
    %1854 = vmatprep.subr.mxu0 0.0
    %1855 = vmatpush1.msra.mxu0 0.0
    %1856 = vmatprep.subr.mxu0 0.0
    %1857 = vmatpush1.msra.mxu0 0.0
    %1858 = vmatprep.subr.mxu0 0.0
    %1859 = vmatpush1.msra.mxu0 0.0
    %1860 = vmatprep.subr.mxu0 0.0
    %1861 = vmatpush1.msra.mxu0 0.0
    %1862 = vmatprep.subr.mxu0 0.0
    %1863 = vmatpush1.msra.mxu0 0.0
    %1864 = vmatprep.subr.mxu0 0.0
    %1865 = vmatpush1.msra.mxu0 %v53
    %1866 = vmatprep.subr.mxu0 0.0
    %1867 = vmatpush1.msra.mxu0 %v52
    %1868 = vmatprep.subr.mxu0 0.0
    %1869 = vmatpush1.msra.mxu0 %v51
    %1870 = vmatprep.subr.mxu0 0.0
    %1871 = vmatpush1.msra.mxu0 %v50
    %1872 = vmatprep.subr.mxu0 0.0
    %1873 = vmatpush2.msra.mxu0 0.0
    %1874 = vmatprep.subr.mxu0 0.0
    %1875 = vmatpush2.msra.mxu0 0.0
    %1876 = vmatprep.subr.mxu0 0.0
    %1877 = vmatpush2.msra.mxu0 0.0
    %1878 = vmatprep.subr.mxu0 0.0
    %1879 = vmatpush2.msra.mxu0 0.0
    %1880 = vmatprep.subr.mxu0 0.0
    %1881 = vmatpush2.msra.mxu0 0.0
    %1882 = vmatprep.subr.mxu0 0.0
    %1883 = vmatpush2.msra.mxu0 0.0
    %1884 = vmatprep.subr.mxu0 0.0
    %1885 = vmatpush2.msra.mxu0 0.0
    %1886 = vmatprep.subr.mxu0 0.0
    %1887 = vmatpush2.msra.mxu0 0.0
    %1888 = vmatprep.subr.mxu0 0.0
    %1889 = vmatpush2.msra.mxu0 0.0
    %1890 = vmatprep.subr.mxu0 0.0
    %1891 = vmatpush2.msra.mxu0 0.0
    %1892 = vmatprep.subr.mxu0 0.0
    %1893 = vmatpush2.msra.mxu0 0.0
    %1894 = vmatprep.subr.mxu0 0.0
    %1895 = vmatpush2.msra.mxu0 0.0
    %1896 = vmatprep.subr.mxu0 0.0
    %1897 = vmatpush2.msra.mxu0 0.0
    %1898 = vmatprep.subr.mxu0 0.0
    %1899 = vmatpush2.msra.mxu0 0.0
    %1900 = vmatprep.subr.mxu0 0.0
    %1901 = vmatpush2.msra.mxu0 0.0
    %1902 = vmatprep.subr.mxu0 0.0
    %1903 = vmatpush2.msra.mxu0 0.0
    %1904 = vmatprep.mubr.f32.mxu0 0.0
    %1905 = vmatmul.mubr.f32.gmra.mxu0 %v1678
    %v1906 = vpop.f32.mrf.mxu0
    %v1907 = vadd.f32 %v629, %v1906
    %v1908 = vpop.f32.mrf.mxu0
    %1909 = vdwg.mxu0
    %v1910 = vmul.f32 %v1828, %v1907
    %v1911 = vadd.f32 %v1839, %v1910
    %v1912 = vtanh.pop %v1911
    %v1913 = vsub.f32 1.0, %v1837
    %v1914 = vmul.f32 %v1913, %v1912
    %v1915 = vmul.f32 %v1837, %v1674
    %v1916 = vadd.f32 %v1914, %v1915
    %s1917 = scalar_lea.vmem %s5, 40
    %1918 = vst.msk [vmem:[%s1917] sm:$0xff] %vm74, %v1916
    %v1920 = vsel %vm74, %v1916, 0
    %1922 = vmatprep.subr.mxu0 0.0
    %1923 = vmatpush1.msra.mxu0 0.0
    %1924 = vmatprep.subr.mxu0 0.0
    %1925 = vmatpush1.msra.mxu0 0.0
    %1926 = vmatprep.subr.mxu0 0.0
    %1927 = vmatpush1.msra.mxu0 0.0
    %1928 = vmatprep.subr.mxu0 0.0
    %1929 = vmatpush1.msra.mxu0 0.0
    %1930 = vmatprep.subr.mxu0 0.0
    %1931 = vmatpush1.msra.mxu0 0.0
    %1932 = vmatprep.subr.mxu0 0.0
    %1933 = vmatpush1.msra.mxu0 0.0
    %1934 = vmatprep.subr.mxu0 0.0
    %1935 = vmatpush1.msra.mxu0 0.0
    %1936 = vmatprep.subr.mxu0 0.0
    %1937 = vmatpush1.msra.mxu0 0.0
    %1938 = vmatprep.subr.mxu0 0.0
    %1939 = vmatpush1.msra.mxu0 0.0
    %1940 = vmatprep.subr.mxu0 0.0
    %1941 = vmatpush1.msra.mxu0 0.0
    %1942 = vmatprep.subr.mxu0 0.0
    %1943 = vmatpush1.msra.mxu0 0.0
    %1944 = vmatprep.subr.mxu0 0.0
    %1945 = vmatpush1.msra.mxu0 0.0
    %1946 = vmatprep.subr.mxu0 0.0
    %1947 = vmatpush1.msra.mxu0 %v43
    %1948 = vmatprep.subr.mxu0 0.0
    %1949 = vmatpush1.msra.mxu0 %v42
    %1950 = vmatprep.subr.mxu0 0.0
    %1951 = vmatpush1.msra.mxu0 %v41
    %1952 = vmatprep.subr.mxu0 0.0
    %1953 = vmatpush1.msra.mxu0 %v40
    %1954 = vmatprep.subr.mxu0 0.0
    %1955 = vmatpush2.msra.mxu0 0.0
    %1956 = vmatprep.subr.mxu0 0.0
    %1957 = vmatpush2.msra.mxu0 0.0
    %1958 = vmatprep.subr.mxu0 0.0
    %1959 = vmatpush2.msra.mxu0 0.0
    %1960 = vmatprep.subr.mxu0 0.0
    %1961 = vmatpush2.msra.mxu0 0.0
    %1962 = vmatprep.subr.mxu0 0.0
    %1963 = vmatpush2.msra.mxu0 0.0
    %1964 = vmatprep.subr.mxu0 0.0
    %1965 = vmatpush2.msra.mxu0 0.0
    %1966 = vmatprep.subr.mxu0 0.0
    %1967 = vmatpush2.msra.mxu0 0.0
    %1968 = vmatprep.subr.mxu0 0.0
    %1969 = vmatpush2.msra.mxu0 0.0
    %1970 = vmatprep.subr.mxu0 0.0
    %1971 = vmatpush2.msra.mxu0 0.0
    %1972 = vmatprep.subr.mxu0 0.0
    %1973 = vmatpush2.msra.mxu0 0.0
    %1974 = vmatprep.subr.mxu0 0.0
    %1975 = vmatpush2.msra.mxu0 0.0
    %1976 = vmatprep.subr.mxu0 0.0
    %1977 = vmatpush2.msra.mxu0 0.0
    %1978 = vmatprep.subr.mxu0 0.0
    %1979 = vmatpush2.msra.mxu0 0.0
    %1980 = vmatprep.subr.mxu0 0.0
    %1981 = vmatpush2.msra.mxu0 0.0
    %1982 = vmatprep.subr.mxu0 0.0
    %1983 = vmatpush2.msra.mxu0 0.0
    %1984 = vmatprep.subr.mxu0 0.0
    %1985 = vmatpush2.msra.mxu0 0.0
    %1986 = vmatprep.mubr.f32.mxu0 0.0
    %1987 = vmatmul.mubr.f32.gmra.mxu0 %v1920
    %v1988 = vpop.f32.mrf.mxu0
    %v1989 = vadd.f32 0.0, %v1988
    %v1990 = vpop.f32.mrf.mxu0
    %1991 = vdwg.mxu0
    %1992 = vmatprep.subr.mxu0 0.0
    %1993 = vmatpush1.msra.mxu0 0.0
    %1994 = vmatprep.subr.mxu0 0.0
    %1995 = vmatpush1.msra.mxu0 0.0
    %1996 = vmatprep.subr.mxu0 0.0
    %1997 = vmatpush1.msra.mxu0 0.0
    %1998 = vmatprep.subr.mxu0 0.0
    %1999 = vmatpush1.msra.mxu0 0.0
    %2000 = vmatprep.subr.mxu0 0.0
    %2001 = vmatpush1.msra.mxu0 0.0
    %2002 = vmatprep.subr.mxu0 0.0
    %2003 = vmatpush1.msra.mxu0 0.0
    %2004 = vmatprep.subr.mxu0 0.0
    %2005 = vmatpush1.msra.mxu0 0.0
    %2006 = vmatprep.subr.mxu0 0.0
    %2007 = vmatpush1.msra.mxu0 0.0
    %2008 = vmatprep.subr.mxu0 0.0
    %2009 = vmatpush1.msra.mxu0 0.0
    %2010 = vmatprep.subr.mxu0 0.0
    %2011 = vmatpush1.msra.mxu0 0.0
    %2012 = vmatprep.subr.mxu0 0.0
    %2013 = vmatpush1.msra.mxu0 0.0
    %2014 = vmatprep.subr.mxu0 0.0
    %2015 = vmatpush1.msra.mxu0 0.0
    %2016 = vmatprep.subr.mxu0 0.0
    %2017 = vmatpush1.msra.mxu0 %v48
    %2018 = vmatprep.subr.mxu0 0.0
    %2019 = vmatpush1.msra.mxu0 %v47
    %2020 = vmatprep.subr.mxu0 0.0
    %2021 = vmatpush1.msra.mxu0 %v46
    %2022 = vmatprep.subr.mxu0 0.0
    %2023 = vmatpush1.msra.mxu0 %v45
    %2024 = vmatprep.subr.mxu0 0.0
    %2025 = vmatpush2.msra.mxu0 0.0
    %2026 = vmatprep.subr.mxu0 0.0
    %2027 = vmatpush2.msra.mxu0 0.0
    %2028 = vmatprep.subr.mxu0 0.0
    %2029 = vmatpush2.msra.mxu0 0.0
    %2030 = vmatprep.subr.mxu0 0.0
    %2031 = vmatpush2.msra.mxu0 0.0
    %2032 = vmatprep.subr.mxu0 0.0
    %2033 = vmatpush2.msra.mxu0 0.0
    %2034 = vmatprep.subr.mxu0 0.0
    %2035 = vmatpush2.msra.mxu0 0.0
    %2036 = vmatprep.subr.mxu0 0.0
    %2037 = vmatpush2.msra.mxu0 0.0
    %2038 = vmatprep.subr.mxu0 0.0
    %2039 = vmatpush2.msra.mxu0 0.0
    %2040 = vmatprep.subr.mxu0 0.0
    %2041 = vmatpush2.msra.mxu0 0.0
    %2042 = vmatprep.subr.mxu0 0.0
    %2043 = vmatpush2.msra.mxu0 0.0
    %2044 = vmatprep.subr.mxu0 0.0
    %2045 = vmatpush2.msra.mxu0 0.0
    %2046 = vmatprep.subr.mxu0 0.0
    %2047 = vmatpush2.msra.mxu0 0.0
    %2048 = vmatprep.subr.mxu0 0.0
    %2049 = vmatpush2.msra.mxu0 0.0
    %2050 = vmatprep.subr.mxu0 0.0
    %2051 = vmatpush2.msra.mxu0 0.0
    %2052 = vmatprep.subr.mxu0 0.0
    %2053 = vmatpush2.msra.mxu0 0.0
    %2054 = vmatprep.subr.mxu0 0.0
    %2055 = vmatpush2.msra.mxu0 0.0
    %2056 = vmatprep.mubr.f32.mxu0 0.0
    %2057 = vmatmul.mubr.f32.gmra.mxu0 %v1920
    %v2058 = vpop.f32.mrf.mxu0
    %v2059 = vadd.f32 0.0, %v2058
    %v2060 = vpop.f32.mrf.mxu0
    %2061 = vdwg.mxu0
    %s2062 = scalar_lea.vmem [#allocation2], 48
    %v2063 = vld [vmem:[%s2062] sm:$0xff]
    %v2064 = vadd.f32 %v2063, %v1989
    %v2065 = vxor.u32 %v2064, 2147483648
    %v2066 = vmul.f32 %v2065, 1.442695
    %v2067 = vpow.pop %v2066
    %v2068 = vadd.f32 %v2067, 1.0
    %v2069 = vrcp.pop %v2068
    %v2070 = vmul.f32 1.0, %v2069
    %s2071 = scalar_lea.vmem [#allocation3], 48
    %v2072 = vld [vmem:[%s2071] sm:$0xff]
    %v2073 = vadd.f32 %v2072, %v2059
    %v2074 = vxor.u32 %v2073, 2147483648
    %v2075 = vmul.f32 %v2074, 1.442695
    %v2076 = vpow.pop %v2075
    %v2077 = vadd.f32 %v2076, 1.0
    %v2078 = vrcp.pop %v2077
    %v2079 = vmul.f32 1.0, %v2078
    %s2080 = scalar_lea.vmem [#allocation4], 48
    %v2081 = vld [vmem:[%s2080] sm:$0xff]
    %2082 = vmatprep.subr.mxu0 0.0
    %2083 = vmatpush1.msra.mxu0 0.0
    %2084 = vmatprep.subr.mxu0 0.0
    %2085 = vmatpush1.msra.mxu0 0.0
    %2086 = vmatprep.subr.mxu0 0.0
    %2087 = vmatpush1.msra.mxu0 0.0
    %2088 = vmatprep.subr.mxu0 0.0
    %2089 = vmatpush1.msra.mxu0 0.0
    %2090 = vmatprep.subr.mxu0 0.0
    %2091 = vmatpush1.msra.mxu0 0.0
    %2092 = vmatprep.subr.mxu0 0.0
    %2093 = vmatpush1.msra.mxu0 0.0
    %2094 = vmatprep.subr.mxu0 0.0
    %2095 = vmatpush1.msra.mxu0 0.0
    %2096 = vmatprep.subr.mxu0 0.0
    %2097 = vmatpush1.msra.mxu0 0.0
    %2098 = vmatprep.subr.mxu0 0.0
    %2099 = vmatpush1.msra.mxu0 0.0
    %2100 = vmatprep.subr.mxu0 0.0
    %2101 = vmatpush1.msra.mxu0 0.0
    %2102 = vmatprep.subr.mxu0 0.0
    %2103 = vmatpush1.msra.mxu0 0.0
    %2104 = vmatprep.subr.mxu0 0.0
    %2105 = vmatpush1.msra.mxu0 0.0
    %2106 = vmatprep.subr.mxu0 0.0
    %2107 = vmatpush1.msra.mxu0 %v53
    %2108 = vmatprep.subr.mxu0 0.0
    %2109 = vmatpush1.msra.mxu0 %v52
    %2110 = vmatprep.subr.mxu0 0.0
    %2111 = vmatpush1.msra.mxu0 %v51
    %2112 = vmatprep.subr.mxu0 0.0
    %2113 = vmatpush1.msra.mxu0 %v50
    %2114 = vmatprep.subr.mxu0 0.0
    %2115 = vmatpush2.msra.mxu0 0.0
    %2116 = vmatprep.subr.mxu0 0.0
    %2117 = vmatpush2.msra.mxu0 0.0
    %2118 = vmatprep.subr.mxu0 0.0
    %2119 = vmatpush2.msra.mxu0 0.0
    %2120 = vmatprep.subr.mxu0 0.0
    %2121 = vmatpush2.msra.mxu0 0.0
    %2122 = vmatprep.subr.mxu0 0.0
    %2123 = vmatpush2.msra.mxu0 0.0
    %2124 = vmatprep.subr.mxu0 0.0
    %2125 = vmatpush2.msra.mxu0 0.0
    %2126 = vmatprep.subr.mxu0 0.0
    %2127 = vmatpush2.msra.mxu0 0.0
    %2128 = vmatprep.subr.mxu0 0.0
    %2129 = vmatpush2.msra.mxu0 0.0
    %2130 = vmatprep.subr.mxu0 0.0
    %2131 = vmatpush2.msra.mxu0 0.0
    %2132 = vmatprep.subr.mxu0 0.0
    %2133 = vmatpush2.msra.mxu0 0.0
    %2134 = vmatprep.subr.mxu0 0.0
    %2135 = vmatpush2.msra.mxu0 0.0
    %2136 = vmatprep.subr.mxu0 0.0
    %2137 = vmatpush2.msra.mxu0 0.0
    %2138 = vmatprep.subr.mxu0 0.0
    %2139 = vmatpush2.msra.mxu0 0.0
    %2140 = vmatprep.subr.mxu0 0.0
    %2141 = vmatpush2.msra.mxu0 0.0
    %2142 = vmatprep.subr.mxu0 0.0
    %2143 = vmatpush2.msra.mxu0 0.0
    %2144 = vmatprep.subr.mxu0 0.0
    %2145 = vmatpush2.msra.mxu0 0.0
    %2146 = vmatprep.mubr.f32.mxu0 0.0
    %2147 = vmatmul.mubr.f32.gmra.mxu0 %v1920
    %v2148 = vpop.f32.mrf.mxu0
    %v2149 = vadd.f32 %v629, %v2148
    %v2150 = vpop.f32.mrf.mxu0
    %2151 = vdwg.mxu0
    %v2152 = vmul.f32 %v2070, %v2149
    %v2153 = vadd.f32 %v2081, %v2152
    %v2154 = vtanh.pop %v2153
    %v2155 = vsub.f32 1.0, %v2079
    %v2156 = vmul.f32 %v2155, %v2154
    %v2157 = vmul.f32 %v2079, %v1916
    %v2158 = vadd.f32 %v2156, %v2157
    %s2159 = scalar_lea.vmem %s5, 48
    %2160 = vst.msk [vmem:[%s2159] sm:$0xff] %vm74, %v2158
    %v2162 = vsel %vm74, %v2158, 0
    %2164 = vmatprep.subr.mxu0 0.0
    %2165 = vmatpush1.msra.mxu0 0.0
    %2166 = vmatprep.subr.mxu0 0.0
    %2167 = vmatpush1.msra.mxu0 0.0
    %2168 = vmatprep.subr.mxu0 0.0
    %2169 = vmatpush1.msra.mxu0 0.0
    %2170 = vmatprep.subr.mxu0 0.0
    %2171 = vmatpush1.msra.mxu0 0.0
    %2172 = vmatprep.subr.mxu0 0.0
    %2173 = vmatpush1.msra.mxu0 0.0
    %2174 = vmatprep.subr.mxu0 0.0
    %2175 = vmatpush1.msra.mxu0 0.0
    %2176 = vmatprep.subr.mxu0 0.0
    %2177 = vmatpush1.msra.mxu0 0.0
    %2178 = vmatprep.subr.mxu0 0.0
    %2179 = vmatpush1.msra.mxu0 0.0
    %2180 = vmatprep.subr.mxu0 0.0
    %2181 = vmatpush1.msra.mxu0 0.0
    %2182 = vmatprep.subr.mxu0 0.0
    %2183 = vmatpush1.msra.mxu0 0.0
    %2184 = vmatprep.subr.mxu0 0.0
    %2185 = vmatpush1.msra.mxu0 0.0
    %2186 = vmatprep.subr.mxu0 0.0
    %2187 = vmatpush1.msra.mxu0 0.0
    %2188 = vmatprep.subr.mxu0 0.0
    %2189 = vmatpush1.msra.mxu0 %v43
    %2190 = vmatprep.subr.mxu0 0.0
    %2191 = vmatpush1.msra.mxu0 %v42
    %2192 = vmatprep.subr.mxu0 0.0
    %2193 = vmatpush1.msra.mxu0 %v41
    %2194 = vmatprep.subr.mxu0 0.0
    %2195 = vmatpush1.msra.mxu0 %v40
    %2196 = vmatprep.subr.mxu0 0.0
    %2197 = vmatpush2.msra.mxu0 0.0
    %2198 = vmatprep.subr.mxu0 0.0
    %2199 = vmatpush2.msra.mxu0 0.0
    %2200 = vmatprep.subr.mxu0 0.0
    %2201 = vmatpush2.msra.mxu0 0.0
    %2202 = vmatprep.subr.mxu0 0.0
    %2203 = vmatpush2.msra.mxu0 0.0
    %2204 = vmatprep.subr.mxu0 0.0
    %2205 = vmatpush2.msra.mxu0 0.0
    %2206 = vmatprep.subr.mxu0 0.0
    %2207 = vmatpush2.msra.mxu0 0.0
    %2208 = vmatprep.subr.mxu0 0.0
    %2209 = vmatpush2.msra.mxu0 0.0
    %2210 = vmatprep.subr.mxu0 0.0
    %2211 = vmatpush2.msra.mxu0 0.0
    %2212 = vmatprep.subr.mxu0 0.0
    %2213 = vmatpush2.msra.mxu0 0.0
    %2214 = vmatprep.subr.mxu0 0.0
    %2215 = vmatpush2.msra.mxu0 0.0
    %2216 = vmatprep.subr.mxu0 0.0
    %2217 = vmatpush2.msra.mxu0 0.0
    %2218 = vmatprep.subr.mxu0 0.0
    %2219 = vmatpush2.msra.mxu0 0.0
    %2220 = vmatprep.subr.mxu0 0.0
    %2221 = vmatpush2.msra.mxu0 0.0
    %2222 = vmatprep.subr.mxu0 0.0
    %2223 = vmatpush2.msra.mxu0 0.0
    %2224 = vmatprep.subr.mxu0 0.0
    %2225 = vmatpush2.msra.mxu0 0.0
    %2226 = vmatprep.subr.mxu0 0.0
    %2227 = vmatpush2.msra.mxu0 0.0
    %2228 = vmatprep.mubr.f32.mxu0 0.0
    %2229 = vmatmul.mubr.f32.gmra.mxu0 %v2162
    %v2230 = vpop.f32.mrf.mxu0
    %v2231 = vadd.f32 0.0, %v2230
    %v2232 = vpop.f32.mrf.mxu0
    %2233 = vdwg.mxu0
    %2234 = vmatprep.subr.mxu0 0.0
    %2235 = vmatpush1.msra.mxu0 0.0
    %2236 = vmatprep.subr.mxu0 0.0
    %2237 = vmatpush1.msra.mxu0 0.0
    %2238 = vmatprep.subr.mxu0 0.0
    %2239 = vmatpush1.msra.mxu0 0.0
    %2240 = vmatprep.subr.mxu0 0.0
    %2241 = vmatpush1.msra.mxu0 0.0
    %2242 = vmatprep.subr.mxu0 0.0
    %2243 = vmatpush1.msra.mxu0 0.0
    %2244 = vmatprep.subr.mxu0 0.0
    %2245 = vmatpush1.msra.mxu0 0.0
    %2246 = vmatprep.subr.mxu0 0.0
    %2247 = vmatpush1.msra.mxu0 0.0
    %2248 = vmatprep.subr.mxu0 0.0
    %2249 = vmatpush1.msra.mxu0 0.0
    %2250 = vmatprep.subr.mxu0 0.0
    %2251 = vmatpush1.msra.mxu0 0.0
    %2252 = vmatprep.subr.mxu0 0.0
    %2253 = vmatpush1.msra.mxu0 0.0
    %2254 = vmatprep.subr.mxu0 0.0
    %2255 = vmatpush1.msra.mxu0 0.0
    %2256 = vmatprep.subr.mxu0 0.0
    %2257 = vmatpush1.msra.mxu0 0.0
    %2258 = vmatprep.subr.mxu0 0.0
    %2259 = vmatpush1.msra.mxu0 %v48
    %2260 = vmatprep.subr.mxu0 0.0
    %2261 = vmatpush1.msra.mxu0 %v47
    %2262 = vmatprep.subr.mxu0 0.0
    %2263 = vmatpush1.msra.mxu0 %v46
    %2264 = vmatprep.subr.mxu0 0.0
    %2265 = vmatpush1.msra.mxu0 %v45
    %2266 = vmatprep.subr.mxu0 0.0
    %2267 = vmatpush2.msra.mxu0 0.0
    %2268 = vmatprep.subr.mxu0 0.0
    %2269 = vmatpush2.msra.mxu0 0.0
    %2270 = vmatprep.subr.mxu0 0.0
    %2271 = vmatpush2.msra.mxu0 0.0
    %2272 = vmatprep.subr.mxu0 0.0
    %2273 = vmatpush2.msra.mxu0 0.0
    %2274 = vmatprep.subr.mxu0 0.0
    %2275 = vmatpush2.msra.mxu0 0.0
    %2276 = vmatprep.subr.mxu0 0.0
    %2277 = vmatpush2.msra.mxu0 0.0
    %2278 = vmatprep.subr.mxu0 0.0
    %2279 = vmatpush2.msra.mxu0 0.0
    %2280 = vmatprep.subr.mxu0 0.0
    %2281 = vmatpush2.msra.mxu0 0.0
    %2282 = vmatprep.subr.mxu0 0.0
    %2283 = vmatpush2.msra.mxu0 0.0
    %2284 = vmatprep.subr.mxu0 0.0
    %2285 = vmatpush2.msra.mxu0 0.0
    %2286 = vmatprep.subr.mxu0 0.0
    %2287 = vmatpush2.msra.mxu0 0.0
    %2288 = vmatprep.subr.mxu0 0.0
    %2289 = vmatpush2.msra.mxu0 0.0
    %2290 = vmatprep.subr.mxu0 0.0
    %2291 = vmatpush2.msra.mxu0 0.0
    %2292 = vmatprep.subr.mxu0 0.0
    %2293 = vmatpush2.msra.mxu0 0.0
    %2294 = vmatprep.subr.mxu0 0.0
    %2295 = vmatpush2.msra.mxu0 0.0
    %2296 = vmatprep.subr.mxu0 0.0
    %2297 = vmatpush2.msra.mxu0 0.0
    %2298 = vmatprep.mubr.f32.mxu0 0.0
    %2299 = vmatmul.mubr.f32.gmra.mxu0 %v2162
    %v2300 = vpop.f32.mrf.mxu0
    %v2301 = vadd.f32 0.0, %v2300
    %v2302 = vpop.f32.mrf.mxu0
    %2303 = vdwg.mxu0
    %s2304 = scalar_lea.vmem [#allocation2], 56
    %v2305 = vld [vmem:[%s2304] sm:$0xff]
    %v2306 = vadd.f32 %v2305, %v2231
    %v2307 = vxor.u32 %v2306, 2147483648
    %v2308 = vmul.f32 %v2307, 1.442695
    %v2309 = vpow.pop %v2308
    %v2310 = vadd.f32 %v2309, 1.0
    %v2311 = vrcp.pop %v2310
    %v2312 = vmul.f32 1.0, %v2311
    %s2313 = scalar_lea.vmem [#allocation3], 56
    %v2314 = vld [vmem:[%s2313] sm:$0xff]
    %v2315 = vadd.f32 %v2314, %v2301
    %v2316 = vxor.u32 %v2315, 2147483648
    %v2317 = vmul.f32 %v2316, 1.442695
    %v2318 = vpow.pop %v2317
    %v2319 = vadd.f32 %v2318, 1.0
    %v2320 = vrcp.pop %v2319
    %v2321 = vmul.f32 1.0, %v2320
    %s2322 = scalar_lea.vmem [#allocation4], 56
    %v2323 = vld [vmem:[%s2322] sm:$0xff]
    %2324 = vmatprep.subr.mxu0 0.0
    %2325 = vmatpush1.msra.mxu0 0.0
    %2326 = vmatprep.subr.mxu0 0.0
    %2327 = vmatpush1.msra.mxu0 0.0
    %2328 = vmatprep.subr.mxu0 0.0
    %2329 = vmatpush1.msra.mxu0 0.0
    %2330 = vmatprep.subr.mxu0 0.0
    %2331 = vmatpush1.msra.mxu0 0.0
    %2332 = vmatprep.subr.mxu0 0.0
    %2333 = vmatpush1.msra.mxu0 0.0
    %2334 = vmatprep.subr.mxu0 0.0
    %2335 = vmatpush1.msra.mxu0 0.0
    %2336 = vmatprep.subr.mxu0 0.0
    %2337 = vmatpush1.msra.mxu0 0.0
    %2338 = vmatprep.subr.mxu0 0.0
    %2339 = vmatpush1.msra.mxu0 0.0
    %2340 = vmatprep.subr.mxu0 0.0
    %2341 = vmatpush1.msra.mxu0 0.0
    %2342 = vmatprep.subr.mxu0 0.0
    %2343 = vmatpush1.msra.mxu0 0.0
    %2344 = vmatprep.subr.mxu0 0.0
    %2345 = vmatpush1.msra.mxu0 0.0
    %2346 = vmatprep.subr.mxu0 0.0
    %2347 = vmatpush1.msra.mxu0 0.0
    %2348 = vmatprep.subr.mxu0 0.0
    %2349 = vmatpush1.msra.mxu0 %v53
    %2350 = vmatprep.subr.mxu0 0.0
    %2351 = vmatpush1.msra.mxu0 %v52
    %2352 = vmatprep.subr.mxu0 0.0
    %2353 = vmatpush1.msra.mxu0 %v51
    %2354 = vmatprep.subr.mxu0 0.0
    %2355 = vmatpush1.msra.mxu0 %v50
    %2356 = vmatprep.subr.mxu0 0.0
    %2357 = vmatpush2.msra.mxu0 0.0
    %2358 = vmatprep.subr.mxu0 0.0
    %2359 = vmatpush2.msra.mxu0 0.0
    %2360 = vmatprep.subr.mxu0 0.0
    %2361 = vmatpush2.msra.mxu0 0.0
    %2362 = vmatprep.subr.mxu0 0.0
    %2363 = vmatpush2.msra.mxu0 0.0
    %2364 = vmatprep.subr.mxu0 0.0
    %2365 = vmatpush2.msra.mxu0 0.0
    %2366 = vmatprep.subr.mxu0 0.0
    %2367 = vmatpush2.msra.mxu0 0.0
    %2368 = vmatprep.subr.mxu0 0.0
    %2369 = vmatpush2.msra.mxu0 0.0
    %2370 = vmatprep.subr.mxu0 0.0
    %2371 = vmatpush2.msra.mxu0 0.0
    %2372 = vmatprep.subr.mxu0 0.0
    %2373 = vmatpush2.msra.mxu0 0.0
    %2374 = vmatprep.subr.mxu0 0.0
    %2375 = vmatpush2.msra.mxu0 0.0
    %2376 = vmatprep.subr.mxu0 0.0
    %2377 = vmatpush2.msra.mxu0 0.0
    %2378 = vmatprep.subr.mxu0 0.0
    %2379 = vmatpush2.msra.mxu0 0.0
    %2380 = vmatprep.subr.mxu0 0.0
    %2381 = vmatpush2.msra.mxu0 0.0
    %2382 = vmatprep.subr.mxu0 0.0
    %2383 = vmatpush2.msra.mxu0 0.0
    %2384 = vmatprep.subr.mxu0 0.0
    %2385 = vmatpush2.msra.mxu0 0.0
    %2386 = vmatprep.subr.mxu0 0.0
    %2387 = vmatpush2.msra.mxu0 0.0
    %2388 = vmatprep.mubr.f32.mxu0 0.0
    %2389 = vmatmul.mubr.f32.gmra.mxu0 %v2162
    %v2390 = vpop.f32.mrf.mxu0
    %v2391 = vadd.f32 %v629, %v2390
    %v2392 = vpop.f32.mrf.mxu0
    %2393 = vdwg.mxu0
    %v2394 = vmul.f32 %v2312, %v2391
    %v2395 = vadd.f32 %v2323, %v2394
    %v2396 = vtanh.pop %v2395
    %v2397 = vsub.f32 1.0, %v2321
    %v2398 = vmul.f32 %v2397, %v2396
    %v2399 = vmul.f32 %v2321, %v2158
    %v2400 = vadd.f32 %v2398, %v2399
    %s2401 = scalar_lea.vmem %s5, 56
    %2402 = vst.msk [vmem:[%s2401] sm:$0xff] %vm74, %v2400
    %2403 = vst.msk [vmem:[#allocation5] sm:$0xff] %vm74, %v2400
    // Predicated region
    $region30: #{tpu_custom_call.1} parent=1 // pred_check
      _
    $region31: #{tpu_custom_call.1} parent=1 // pred_check_branch
      %2405 = sbr.rel (0) target = $region33
    $region32: #{tpu_custom_call.1} parent=1 // pred_region
      _
    $region33: #{tpu_custom_call.1} parent=1 // pred_fallthru
      _
    // Predicated region
    $region34: #{tpu_custom_call.1} parent=1 // pred_check
      _
    $region35: #{tpu_custom_call.1} parent=1 // pred_check_branch
      %2407 = sbr.rel (0) target = $region37
    $region36: #{tpu_custom_call.1} parent=1 // pred_region
      _
    $region37: #{tpu_custom_call.1} parent=1 // pred_fallthru
      _
    %2408 = vsyncpa [#allocation7], 1

</llo_original>
